<compile_context>
chip_gen: v6e
topology: v6e:2x2x1
jax: 0.10.0
libtpu: 0.0.40
codegen_flags: <defaults>
</compile_context>

<pallas_src>
import jax
import jax.numpy as jnp
from jax import lax
from jax.experimental import pallas as pl
from jax.experimental.pallas import tpu as pltpu


def _row_tile(n, limit):
    """Largest divisor of n that is <= limit (always >= 1)."""
    t = min(n, limit)
    while n % t:
        t -= 1
    return t


# ------------------------------ kernels -------------------------------------

def _upconv_phase_kernel(xm_ref, xh_ref, w_ref, b_ref, y_ref, s1_ref, s2_ref):
    """4-phase ConvTranspose2d(3, 2, 1, 1) for one (batch, row-tile) block.

    xm_ref: (1, TH, W+1, C_in)   rows [i*TH, i*TH+TH) of the padded input
    xh_ref: (1, 1,  W+1, C_in)   halo row i*TH+TH
    w_ref : (4, C_in, 4*C_out)   per-shift weights; columns = [ee|eo|oe|oo]
    b_ref : (1, 4*C_out)         bias tiled over the 4 phases
    y_ref : (1, TH, W, 4*C_out)  phase-major conv output
    s1_ref: (1, 1, 1, C_out)     fused BN batch stats: per-channel sum
    s2_ref: (1, 1, 1, C_out)     per-channel sum of squares
    """
    _, TH, Wp, _ = xm_ref.shape
    W = Wp - 1
    C = s1_ref.shape[-1]

    # extend the row tile with its 1-row halo
    x_ext = jnp.concatenate([xm_ref[0], xh_ref[0]], axis=0)   # (TH+1, W+1, Cin)

    # the four stride-2 shifts of the (un-dilated) input used by the 4 phases
    s00 = x_ext[0:TH, 0:W, :].reshape(TH * W, -1)
    s01 = x_ext[0:TH, 1:Wp, :].reshape(TH * W, -1)
    s10 = x_ext[1:TH + 1, 0:W, :].reshape(TH * W, -1)
    s11 = x_ext[1:TH + 1, 1:Wp, :].reshape(TH * W, -1)

    r = (jnp.dot(s00, w_ref[0], preferred_element_type=jnp.float32)
         + jnp.dot(s01, w_ref[1], preferred_element_type=jnp.float32)
         + jnp.dot(s10, w_ref[2], preferred_element_type=jnp.float32)
         + jnp.dot(s11, w_ref[3], preferred_element_type=jnp.float32))
    r = r + b_ref[...]                                        # (TH*W, 4*C_out)

    # fused BatchNorm batch statistics (f32 sum / sum-of-squares per channel)
    ssum = jnp.sum(r, axis=0, keepdims=True)                  # (1, 4*C_out)
    ssq = jnp.sum(r * r, axis=0, keepdims=True)
    s1_ref[...] = (ssum[:, 0:C] + ssum[:, C:2 * C]
                   + ssum[:, 2 * C:3 * C] + ssum[:, 3 * C:]).reshape(1, 1, 1, C)
    s2_ref[...] = (ssq[:, 0:C] + ssq[:, C:2 * C]
                   + ssq[:, 2 * C:3 * C] + ssq[:, 3 * C:]).reshape(1, 1, 1, C)

    y_ref[...] = r.reshape(1, TH, W, 4 * C).astype(y_ref.dtype)


def _conv3x3_kernel(xp_ref, w_ref, b_ref, y_ref, s1_ref, s2_ref):
    """3x3 stride-1 'same' conv for one batch element (secondary path).

    xp_ref: (1, H+2, W+2, C_in) zero-padded input
    w_ref : (9, C_in, C_out)    tap-major weights
    b_ref : (1, C_out)
    y_ref : (1, H, W, C_out)
    s1/s2 : (1, 1, 1, C_out)    fused BatchNorm batch stats
    """
    _, Hp, Wp, C_in = xp_ref.shape
    H, W = Hp - 2, Wp - 2
    C = s1_ref.shape[-1]
    x = xp_ref[0]
    r = jnp.zeros((H * W, C), jnp.float32)
    for di in range(3):
        for dj in range(3):
            patch = x[di:di + H, dj:dj + W, :].reshape(H * W, C_in)
            r = r + jnp.dot(patch, w_ref[di * 3 + dj],
                            preferred_element_type=jnp.float32)
    r = r + b_ref[...]
    s1_ref[...] = jnp.sum(r, axis=0, keepdims=True).reshape(1, 1, 1, C)
    s2_ref[...] = jnp.sum(r * r, axis=0, keepdims=True).reshape(1, 1, 1, C)
    y_ref[...] = r.reshape(1, H, W, C).astype(y_ref.dtype)


def _bn_lrelu_kernel(y_ref, sc_ref, sh_ref, o_ref):
    """Elementwise y * scale + shift followed by LeakyReLU(0.2).

    y_ref : (1, TR, W, L)  conv output tile (L = channels [* phases])
    sc_ref: (1, L)         per-lane scale  (gamma * rsqrt(var + eps))
    sh_ref: (1, L)         per-lane shift  (beta - mean * scale)
    """
    z = y_ref[...] * sc_ref[...] + sh_ref[...]
    o_ref[...] = jnp.where(z >= 0, z, 0.2 * z)


# ------------------------------ wrappers -------------------------------------

def _upconv(x, w_t, bias, row_tile):
    """ConvTranspose2d(C_in, C_out, 3, stride=2, padding=1, output_padding=1).

    x: (N, H, W, C_in) NHWC.  Returns (phase-major y (N, H, W, 4*C_out),
    per-tile channel sums (N, HT, 1, C_out), sums of squares (same shape)).
    """
    N, H, W, C_in = x.shape
    C_out = w_t.shape[1]
    TH = _row_tile(H, row_tile)
    HT = H // TH

    def wt(i, j):
        return w_t[:, :, i, j]                       # (C_in, C_out)

    Z = jnp.zeros((C_in, C_out), w_t.dtype)
    # Row k = contribution of input shift k in {(0,0),(0,1),(1,0),(1,1)};
    # columns grouped as the 4 output phases [ee | eo | oe | oo].
    w_phase = jnp.stack([
        jnp.concatenate([wt(1, 1), wt(1, 2), wt(2, 1), wt(2, 2)], axis=1),
        jnp.concatenate([Z,        wt(1, 0), Z,        wt(2, 0)], axis=1),
        jnp.concatenate([Z,        Z,        wt(0, 1), wt(0, 2)], axis=1),
        jnp.concatenate([Z,        Z,        Z,        wt(0, 0)], axis=1),
    ], axis=0).astype(jnp.float32)                   # (4, C_in, 4*C_out)
    b4 = jnp.tile(bias.astype(jnp.float32), 4).reshape(1, 4 * C_out)

    # One zero row/column on the bottom/right is the only padding this
    # formulation needs (it also keeps the halo-row DMA of the last tile
    # in-bounds).  This replaces the 4x larger dilated+padded intermediate.
    xp = jnp.pad(x, ((0, 0), (0, 1), (0, 1), (0, 0)))

    y, s1, s2 = pl.pallas_call(
        _upconv_phase_kernel,
        out_shape=(
            jax.ShapeDtypeStruct((N, H, W, 4 * C_out), jnp.float32),
            jax.ShapeDtypeStruct((N, HT, 1, C_out), jnp.float32),
            jax.ShapeDtypeStruct((N, HT, 1, C_out), jnp.float32),
        ),
        grid=(N, HT),
        in_specs=[
            pl.BlockSpec((1, TH, W + 1, C_in), lambda n, i: (n, i, 0, 0)),
            pl.BlockSpec((1, 1, W + 1, C_in),
                         lambda n, i: (n, (i + 1) * TH, 0, 0)),
            pl.BlockSpec((4, C_in, 4 * C_out), lambda n, i: (0, 0, 0)),
            pl.BlockSpec((1, 4 * C_out), lambda n, i: (0, 0)),
        ],
        out_specs=(
            pl.BlockSpec((1, TH, W, 4 * C_out), lambda n, i: (n, i, 0, 0)),
            pl.BlockSpec((1, 1, 1, C_out), lambda n, i: (n, i, 0, 0)),
            pl.BlockSpec((1, 1, 1, C_out), lambda n, i: (n, i, 0, 0)),
        ),
        compiler_params=pltpu.CompilerParams(
            dimension_semantics=("parallel", "parallel")),
    )(xp, xp, w_phase, b4)
    return y, s1, s2


def _conv3x3(x, w_c, bias):
    """Conv2d(C_in, C_out, 3, stride=1, padding=1) (secondary, stride=False)."""
    N, H, W, C_in = x.shape
    C_out = w_c.shape[0]
    w9 = jnp.transpose(w_c, (2, 3, 1, 0)).reshape(9, C_in, C_out)
    w9 = w9.astype(jnp.float32)
    xp = jnp.pad(x, ((0, 0), (1, 1), (1, 1), (0, 0)))
    y, s1, s2 = pl.pallas_call(
        _conv3x3_kernel,
        out_shape=(
            jax.ShapeDtypeStruct((N, H, W, C_out), jnp.float32),
            jax.ShapeDtypeStruct((N, 1, 1, C_out), jnp.float32),
            jax.ShapeDtypeStruct((N, 1, 1, C_out), jnp.float32),
        ),
        grid=(N,),
        in_specs=[
            pl.BlockSpec((1, H + 2, W + 2, C_in), lambda n: (n, 0, 0, 0)),
            pl.BlockSpec((9, C_in, C_out), lambda n: (0, 0, 0)),
            pl.BlockSpec((1, C_out), lambda n: (0, 0)),
        ],
        out_specs=(
            pl.BlockSpec((1, H, W, C_out), lambda n: (n, 0, 0, 0)),
            pl.BlockSpec((1, 1, 1, C_out), lambda n: (n, 0, 0, 0)),
            pl.BlockSpec((1, 1, 1, C_out), lambda n: (n, 0, 0, 0)),
        ),
        compiler_params=pltpu.CompilerParams(
            dimension_semantics=("parallel",)),
    )(xp, w9, bias.astype(jnp.float32).reshape(1, C_out))
    return y, s1, s2


def _bn_lrelu(y, sc_row, sh_row, row_tile=32):
    """Tiled elementwise normalize + LeakyReLU over a (N, R, W, L) tensor."""
    N, R, W, L = y.shape
    TR = _row_tile(R, row_tile)
    return pl.pallas_call(
        _bn_lrelu_kernel,
        out_shape=jax.ShapeDtypeStruct(y.shape, y.dtype),
        grid=(N, R // TR),
        in_specs=[
            pl.BlockSpec((1, TR, W, L), lambda n, i: (n, i, 0, 0)),
            pl.BlockSpec((1, L), lambda n, i: (0, 0)),
            pl.BlockSpec((1, L), lambda n, i: (0, 0)),
        ],
        out_specs=pl.BlockSpec((1, TR, W, L), lambda n, i: (n, i, 0, 0)),
        compiler_params=pltpu.CompilerParams(
            dimension_semantics=("parallel", "parallel")),
    )(y, sc_row, sh_row)


def up_forward(x_nchw, params, *, activate=True, stride=True, row_tile=8):
    """Forward of the PyTorch `up` module.  Input/output are NCHW."""
    x = jnp.transpose(x_nchw, (0, 2, 3, 1)).astype(jnp.float32)   # -> NHWC
    N, H, W, _ = x.shape

    if stride:
        C_out = params["w"].shape[1]
        y, s1, s2 = _upconv(x, params["w"], params["b"], row_tile)
        phases = 4
        out_h, out_w = 2 * H, 2 * W
    else:
        C_out = params["w"].shape[0]
        y, s1, s2 = _conv3x3(x, params["w"], params["b"])
        phases = 1
        out_h, out_w = H, W

    if activate:
        # BatchNorm2d training-mode batch statistics (biased var, eps=1e-5)
        # folded into a per-channel scale/shift, then LeakyReLU(0.2).
        # TODO(synk): running_mean / running_var buffer updates (stateful side
        # effect of nn.BatchNorm2d) are not reproduced.
        count = N * out_h * out_w
        mean = jnp.sum(s1, axis=(0, 1, 2)) / count
        var = jnp.maximum(jnp.sum(s2, axis=(0, 1, 2)) / count - mean * mean,
                          0.0)
        scale = params["gamma"] * lax.rsqrt(var + 1e-5)
        shift = params["beta"] - mean * scale
        sc_row = jnp.tile(scale, phases).reshape(1, phases * C_out)
        sh_row = jnp.tile(shift, phases).reshape(1, phases * C_out)
        y = _bn_lrelu(y, sc_row, sh_row)

    if stride:
        # phase-major (N, H, W, [ee|eo|oe|oo]*C) -> NCHW (N, C, 2H, 2W);
        # this single transpose replaces the NHWC->NCHW transpose that any
        # layout needs at the PyTorch boundary.
        z = y.reshape(N, H, W, 2, 2, C_out)
        out = jnp.transpose(z, (0, 5, 1, 3, 2, 4))
        return out.reshape(N, C_out, out_h, out_w)
    return jnp.transpose(y, (0, 3, 1, 2))


# -------------------------------- demo ---------------------------------------

if __name__ == "__main__":
    N, C_in, C_out, H, W = 2, 4, 8, 16, 16
    key = jax.random.PRNGKey(0)
    kx, kw, kb, kw2, kb2 = jax.random.split(key, 5)

    x = jax.random.normal(kx, (N, C_in, H, W), jnp.float32)
    x_nhwc = jnp.transpose(x, (0, 2, 3, 1))

    # ---- main path: ConvTranspose2d(4, 8, 3, 2, 1, 1) + BN + LeakyReLU ------
    params = {
        # ConvTranspose2d weight layout: (in_features, out_features, kH, kW)
        "w": 0.1 * jax.random.normal(kw, (C_in, C_out, 3, 3), jnp.float32),
        "b": 0.1 * jax.random.normal(kb, (C_out,), jnp.float32),
        "gamma": 1.0 + 0.1 * jnp.arange(C_out, dtype=jnp.float32),
        "beta": 0.05 * jnp.arange(C_out, dtype=jnp.float32),
    }
    out = jax.block_until_ready(up_forward(x, params))
    assert out.shape == (N, C_out, 2 * H, 2 * W), out.shape

    # independent reference: lax dilated conv + training-mode BN + LeakyReLU
    w_hwio = jnp.transpose(params["w"][:, :, ::-1, ::-1], (2, 3, 0, 1))
    y_ref = lax.conv_general_dilated(
        x_nhwc, w_hwio, window_strides=(1, 1), padding=((1, 2), (1, 2)),
        lhs_dilation=(2, 2),
        dimension_numbers=("NHWC", "HWIO", "NHWC")) + params["b"]
    m = jnp.mean(y_ref, axis=(0, 1, 2), keepdims=True)
    v = jnp.mean((y_ref - m) ** 2, axis=(0, 1, 2), keepdims=True)
    yn = (y_ref - m) * lax.rsqrt(v + 1e-5) * params["gamma"] + params["beta"]
    ref = jnp.transpose(jnp.where(yn >= 0, yn, 0.2 * yn), (0, 3, 1, 2))
    err = float(jnp.max(jnp.abs(out - ref)))
    assert jnp.allclose(out, ref, rtol=1e-3, atol=1e-3), err

    # ---- secondary path: Conv2d(4, 8, 3, 1, 1), no activation ---------------
    params2 = {
        "w": 0.1 * jax.random.normal(kw2, (C_out, C_in, 3, 3), jnp.float32),
        "b": 0.1 * jax.random.normal(kb2, (C_out,), jnp.float32),
        "gamma": jnp.ones((C_out,), jnp.float32),
        "beta": jnp.zeros((C_out,), jnp.float32),
    }
    out2 = jax.block_until_ready(
        up_forward(x, params2, activate=False, stride=False))
    w_hwio2 = jnp.transpose(params2["w"], (2, 3, 1, 0))
    y_ref2 = lax.conv_general_dilated(
        x_nhwc, w_hwio2, window_strides=(1, 1), padding=((1, 1), (1, 1)),
        dimension_numbers=("NHWC", "HWIO", "NHWC")) + params2["b"]
    ref2 = jnp.transpose(y_ref2, (0, 3, 1, 2))
    err2 = float(jnp.max(jnp.abs(out2 - ref2)))
    assert jnp.allclose(out2, ref2, rtol=1e-3, atol=1e-3), err2

    print("KERNEL_OK")
</pallas_src>

<mosaic_0001>
module attributes {stable_mosaic.version = 11 : i64} {
  func.func @_upconv_phase_kernel(%arg0: i32, %arg1: i32, %arg2: memref<1x8x17x4xf32, #tpu.memory_space<vmem>>, %arg3: memref<1x1x17x4xf32, #tpu.memory_space<vmem>>, %arg4: memref<4x4x32xf32, #tpu.memory_space<vmem>>, %arg5: memref<1x32xf32, #tpu.memory_space<vmem>>, %arg6: memref<1x8x16x32xf32, #tpu.memory_space<vmem>>, %arg7: memref<1x1x1x8xf32, #tpu.memory_space<vmem>>, %arg8: memref<1x1x1x8xf32, #tpu.memory_space<vmem>>) attributes {dimension_semantics = [#tpu.dimension_semantics<parallel>, #tpu.dimension_semantics<parallel>], iteration_bounds = array<i64: 2, 2>, scalar_prefetch = 0 : i64, scratch_operands = 0 : i64, tpu.core_type = #tpu.core_type<tc>, window_params = [{transform_indices = @transform_0, window_bounds = array<i64: 1, 8, 17, 4>}, {transform_indices = @transform_1, window_bounds = array<i64: 1, 1, 17, 4>}, {pipeline_mode = #tpu.pipeline_mode<synchronous>, transform_indices = @transform_2, window_bounds = array<i64: 4, 4, 32>}, {pipeline_mode = #tpu.pipeline_mode<synchronous>, transform_indices = @transform_3, window_bounds = array<i64: 1, 32>}, {transform_indices = @transform_4, window_bounds = array<i64: 1, 8, 16, 32>}, {transform_indices = @transform_5, window_bounds = array<i64: 1, 1, 1, 8>}, {transform_indices = @transform_6, window_bounds = array<i64: 1, 1, 1, 8>}]} {
    %c0 = arith.constant 0 : index
    %c0_0 = arith.constant 0 : index
    %c0_1 = arith.constant 0 : index
    %c0_2 = arith.constant 0 : index
    %0 = vector.load %arg2[%c0, %c0_0, %c0_1, %c0_2] : memref<1x8x17x4xf32, #tpu.memory_space<vmem>>, vector<1x8x17x4xf32>
    %1 = vector.shape_cast %0 : vector<1x8x17x4xf32> to vector<8x17x4xf32>
    %c0_3 = arith.constant 0 : index
    %c0_4 = arith.constant 0 : index
    %c0_5 = arith.constant 0 : index
    %c0_6 = arith.constant 0 : index
    %2 = vector.load %arg3[%c0_3, %c0_4, %c0_5, %c0_6] : memref<1x1x17x4xf32, #tpu.memory_space<vmem>>, vector<1x1x17x4xf32>
    %3 = vector.shape_cast %2 : vector<1x1x17x4xf32> to vector<1x17x4xf32>
    %4 = tpu.concatenate %1, %3 in 0 : vector<8x17x4xf32>, vector<1x17x4xf32> -> vector<9x17x4xf32>
    %5 = vector.extract_strided_slice %4 {offsets = [0, 0, 0], sizes = [8, 16, 4], strides = [1, 1, 1]} : vector<9x17x4xf32> to vector<8x16x4xf32>
    %6 = vector.shape_cast %5 : vector<8x16x4xf32> to vector<128x4xf32>
    %7 = vector.extract_strided_slice %4 {offsets = [0, 1, 0], sizes = [8, 16, 4], strides = [1, 1, 1]} : vector<9x17x4xf32> to vector<8x16x4xf32>
    %8 = vector.shape_cast %7 : vector<8x16x4xf32> to vector<128x4xf32>
    %9 = vector.extract_strided_slice %4 {offsets = [1, 0, 0], sizes = [8, 16, 4], strides = [1, 1, 1]} : vector<9x17x4xf32> to vector<8x16x4xf32>
    %10 = vector.shape_cast %9 : vector<8x16x4xf32> to vector<128x4xf32>
    %11 = vector.extract_strided_slice %4 {offsets = [1, 1, 0], sizes = [8, 16, 4], strides = [1, 1, 1]} : vector<9x17x4xf32> to vector<8x16x4xf32>
    %12 = vector.shape_cast %11 : vector<8x16x4xf32> to vector<128x4xf32>
    %c0_7 = arith.constant 0 : index
    %c0_8 = arith.constant 0 : index
    %c0_9 = arith.constant 0 : index
    %13 = vector.load %arg4[%c0_7, %c0_8, %c0_9] : memref<4x4x32xf32, #tpu.memory_space<vmem>>, vector<1x4x32xf32>
    %14 = vector.shape_cast %13 : vector<1x4x32xf32> to vector<4x32xf32>
    %cst = arith.constant dense<0.000000e+00> : vector<128x32xf32>
    %15 = tpu.matmul %6, %14, %cst {dimension_numbers = #tpu.dot_dimension_numbers<[1], [0], [0], [1], [0, 0, 1, 1], [], []>} : vector<128x4xf32>, vector<4x32xf32>, vector<128x32xf32> -> vector<128x32xf32>
    %c1 = arith.constant 1 : index
    %c0_10 = arith.constant 0 : index
    %c0_11 = arith.constant 0 : index
    %16 = vector.load %arg4[%c1, %c0_10, %c0_11] : memref<4x4x32xf32, #tpu.memory_space<vmem>>, vector<1x4x32xf32>
    %17 = vector.shape_cast %16 : vector<1x4x32xf32> to vector<4x32xf32>
    %cst_12 = arith.constant dense<0.000000e+00> : vector<128x32xf32>
    %18 = tpu.matmul %8, %17, %cst_12 {dimension_numbers = #tpu.dot_dimension_numbers<[1], [0], [0], [1], [0, 0, 1, 1], [], []>} : vector<128x4xf32>, vector<4x32xf32>, vector<128x32xf32> -> vector<128x32xf32>
    %19 = arith.addf %15, %18 : vector<128x32xf32>
    %c2 = arith.constant 2 : index
    %c0_13 = arith.constant 0 : index
    %c0_14 = arith.constant 0 : index
    %20 = vector.load %arg4[%c2, %c0_13, %c0_14] : memref<4x4x32xf32, #tpu.memory_space<vmem>>, vector<1x4x32xf32>
    %21 = vector.shape_cast %20 : vector<1x4x32xf32> to vector<4x32xf32>
    %cst_15 = arith.constant dense<0.000000e+00> : vector<128x32xf32>
    %22 = tpu.matmul %10, %21, %cst_15 {dimension_numbers = #tpu.dot_dimension_numbers<[1], [0], [0], [1], [0, 0, 1, 1], [], []>} : vector<128x4xf32>, vector<4x32xf32>, vector<128x32xf32> -> vector<128x32xf32>
    %23 = arith.addf %19, %22 : vector<128x32xf32>
    %c3 = arith.constant 3 : index
    %c0_16 = arith.constant 0 : index
    %c0_17 = arith.constant 0 : index
    %24 = vector.load %arg4[%c3, %c0_16, %c0_17] : memref<4x4x32xf32, #tpu.memory_space<vmem>>, vector<1x4x32xf32>
    %25 = vector.shape_cast %24 : vector<1x4x32xf32> to vector<4x32xf32>
    %cst_18 = arith.constant dense<0.000000e+00> : vector<128x32xf32>
    %26 = tpu.matmul %12, %25, %cst_18 {dimension_numbers = #tpu.dot_dimension_numbers<[1], [0], [0], [1], [0, 0, 1, 1], [], []>} : vector<128x4xf32>, vector<4x32xf32>, vector<128x32xf32> -> vector<128x32xf32>
    %27 = arith.addf %23, %26 : vector<128x32xf32>
    %c0_19 = arith.constant 0 : index
    %c0_20 = arith.constant 0 : index
    %28 = vector.load %arg5[%c0_19, %c0_20] : memref<1x32xf32, #tpu.memory_space<vmem>>, vector<1x32xf32>
    %29 = vector.broadcast %28 : vector<1x32xf32> to vector<128x32xf32>
    %30 = arith.addf %27, %29 : vector<128x32xf32>
    %cst_21 = arith.constant dense<0.000000e+00> : vector<32xf32>
    %31 = vector.multi_reduction <add>, %30, %cst_21 [0] : vector<128x32xf32> to vector<32xf32>
    %32 = vector.shape_cast %31 : vector<32xf32> to vector<1x32xf32>
    %33 = arith.mulf %30, %30 : vector<128x32xf32>
    %cst_22 = arith.constant dense<0.000000e+00> : vector<32xf32>
    %34 = vector.multi_reduction <add>, %33, %cst_22 [0] : vector<128x32xf32> to vector<32xf32>
    %35 = vector.shape_cast %34 : vector<32xf32> to vector<1x32xf32>
    %36 = vector.extract_strided_slice %32 {offsets = [0, 0], sizes = [1, 8], strides = [1, 1]} : vector<1x32xf32> to vector<1x8xf32>
    %37 = vector.extract_strided_slice %32 {offsets = [0, 8], sizes = [1, 8], strides = [1, 1]} : vector<1x32xf32> to vector<1x8xf32>
    %38 = arith.addf %36, %37 : vector<1x8xf32>
    %39 = vector.extract_strided_slice %32 {offsets = [0, 16], sizes = [1, 8], strides = [1, 1]} : vector<1x32xf32> to vector<1x8xf32>
    %40 = arith.addf %38, %39 : vector<1x8xf32>
    %41 = vector.extract_strided_slice %32 {offsets = [0, 24], sizes = [1, 8], strides = [1, 1]} : vector<1x32xf32> to vector<1x8xf32>
    %42 = arith.addf %40, %41 : vector<1x8xf32>
    %43 = vector.shape_cast %42 : vector<1x8xf32> to vector<1x1x1x8xf32>
    %c0_23 = arith.constant 0 : index
    %c0_24 = arith.constant 0 : index
    %c0_25 = arith.constant 0 : index
    %c0_26 = arith.constant 0 : index
    %44 = vector.load %arg7[%c0_23, %c0_24, %c0_25, %c0_26] : memref<1x1x1x8xf32, #tpu.memory_space<vmem>>, vector<1x1x1x8xf32>
    tpu.vector_store %arg7[%c0_23, %c0_24, %c0_25, %c0_26], %43 {strides = array<i32>} : memref<1x1x1x8xf32, #tpu.memory_space<vmem>>, vector<1x1x1x8xf32>,
    %45 = vector.extract_strided_slice %35 {offsets = [0, 0], sizes = [1, 8], strides = [1, 1]} : vector<1x32xf32> to vector<1x8xf32>
    %46 = vector.extract_strided_slice %35 {offsets = [0, 8], sizes = [1, 8], strides = [1, 1]} : vector<1x32xf32> to vector<1x8xf32>
    %47 = arith.addf %45, %46 : vector<1x8xf32>
    %48 = vector.extract_strided_slice %35 {offsets = [0, 16], sizes = [1, 8], strides = [1, 1]} : vector<1x32xf32> to vector<1x8xf32>
    %49 = arith.addf %47, %48 : vector<1x8xf32>
    %50 = vector.extract_strided_slice %35 {offsets = [0, 24], sizes = [1, 8], strides = [1, 1]} : vector<1x32xf32> to vector<1x8xf32>
    %51 = arith.addf %49, %50 : vector<1x8xf32>
    %52 = vector.shape_cast %51 : vector<1x8xf32> to vector<1x1x1x8xf32>
    %c0_27 = arith.constant 0 : index
    %c0_28 = arith.constant 0 : index
    %c0_29 = arith.constant 0 : index
    %c0_30 = arith.constant 0 : index
    %53 = vector.load %arg8[%c0_27, %c0_28, %c0_29, %c0_30] : memref<1x1x1x8xf32, #tpu.memory_space<vmem>>, vector<1x1x1x8xf32>
    tpu.vector_store %arg8[%c0_27, %c0_28, %c0_29, %c0_30], %52 {strides = array<i32>} : memref<1x1x1x8xf32, #tpu.memory_space<vmem>>, vector<1x1x1x8xf32>,
    %54 = vector.shape_cast %30 : vector<128x32xf32> to vector<1x8x16x32xf32>
    %c0_31 = arith.constant 0 : index
    %c0_32 = arith.constant 0 : index
    %c0_33 = arith.constant 0 : index
    %c0_34 = arith.constant 0 : index
    %55 = vector.load %arg6[%c0_31, %c0_32, %c0_33, %c0_34] : memref<1x8x16x32xf32, #tpu.memory_space<vmem>>, vector<1x8x16x32xf32>
    tpu.vector_store %arg6[%c0_31, %c0_32, %c0_33, %c0_34], %54 {strides = array<i32>} : memref<1x8x16x32xf32, #tpu.memory_space<vmem>>, vector<1x8x16x32xf32>,
    return
  }
  func.func @transform_0(%arg0: i32, %arg1: i32) -> (i32, i32, i32, i32) {
    %c0_i32 = arith.constant 0 : i32
    %c0_i32_0 = arith.constant 0 : i32
    %c0_i32_1 = arith.constant 0 : i32
    return %arg0, %arg1, %c0_i32, %c0_i32_0 : i32, i32, i32, i32
  }
  func.func @transform_1(%arg0: i32, %arg1: i32) -> (i32, i32, i32, i32) {
    %c1_i32 = arith.constant 1 : i32
    %0 = arith.addi %arg1, %c1_i32 : i32
    %c8_i32 = arith.constant 8 : i32
    %1 = arith.muli %0, %c8_i32 : i32
    %c0_i32 = arith.constant 0 : i32
    %c0_i32_0 = arith.constant 0 : i32
    %c0_i32_1 = arith.constant 0 : i32
    return %arg0, %1, %c0_i32, %c0_i32_0 : i32, i32, i32, i32
  }
  func.func @transform_2(%arg0: i32, %arg1: i32) -> (i32, i32, i32) {
    %c0_i32 = arith.constant 0 : i32
    %c0_i32_0 = arith.constant 0 : i32
    %c0_i32_1 = arith.constant 0 : i32
    %c0_i32_2 = arith.constant 0 : i32
    return %c0_i32, %c0_i32_0, %c0_i32_1 : i32, i32, i32
  }
  func.func @transform_3(%arg0: i32, %arg1: i32) -> (i32, i32) {
    %c0_i32 = arith.constant 0 : i32
    %c0_i32_0 = arith.constant 0 : i32
    %c0_i32_1 = arith.constant 0 : i32
    return %c0_i32, %c0_i32_0 : i32, i32
  }
  func.func @transform_4(%arg0: i32, %arg1: i32) -> (i32, i32, i32, i32) {
    %c0_i32 = arith.constant 0 : i32
    %c0_i32_0 = arith.constant 0 : i32
    %c0_i32_1 = arith.constant 0 : i32
    return %arg0, %arg1, %c0_i32, %c0_i32_0 : i32, i32, i32, i32
  }
  func.func @transform_5(%arg0: i32, %arg1: i32) -> (i32, i32, i32, i32) {
    %c0_i32 = arith.constant 0 : i32
    %c0_i32_0 = arith.constant 0 : i32
    %c0_i32_1 = arith.constant 0 : i32
    return %arg0, %arg1, %c0_i32, %c0_i32_0 : i32, i32, i32, i32
  }
  func.func @transform_6(%arg0: i32, %arg1: i32) -> (i32, i32, i32, i32) {
    %c0_i32 = arith.constant 0 : i32
    %c0_i32_0 = arith.constant 0 : i32
    %c0_i32_1 = arith.constant 0 : i32
    return %arg0, %arg1, %c0_i32, %c0_i32_0 : i32, i32, i32, i32
  }
}

</mosaic_0001>

<llo_original>
// kernel: tpu_custom_call.1
$region0: #{tpu_custom_call.1}
  #allocation0 [shape = 'u32[]', space=smem, size = 0x4, offset = 0x4, fixed_abs, tag = 'smem constant byte address 0x4 - core index']
  #allocation1 [shape = 'u32[144,128]{1,0:T(1,128)}', space=vmem, size = 0x12000, scoped, tag = 'internal scratch']
  %s0 = inlined_call_operand.vmem [shape: f32[2,17,17,4], index: 0, kind: input, shape index: {}]
  %s1 = inlined_call_operand.vmem [shape: f32[2,17,17,4], index: 1, kind: input, shape index: {}]
  %s2 = inlined_call_operand.vmem [shape: f32[4,4,32], index: 2, kind: input, shape index: {}]
  %s3 = inlined_call_operand.vmem [shape: f32[1,32], index: 3, kind: input, shape index: {}]
  %s4 = inlined_call_operand.hbm [shape: f32[2,16,16,32], index: 4, kind: output, shape index: {0}]
  %s5 = inlined_call_operand.hbm [shape: f32[2,2,1,8], index: 5, kind: output, shape index: {1}]
  %s6 = inlined_call_operand.hbm [shape: f32[2,2,1,8], index: 6, kind: output, shape index: {2}]
  %7 = xla_tuple %s4, %s5, %s6
  %s8 = sld [smem:[#allocation0]]
  $region65: #{tpu_custom_call.1} parent=0
    _
  %s10 = ssub.s32 1, %s8
  %s11 = scalar_select 0, %s10, %s8
  $region1: #{tpu_custom_call.1} parent=0
    #allocation2 [shape = 'u8[131072]{0}', space=vmem, size = 0x20000, scoped, tag = 'output window, operand 0']
    #allocation3 [shape = 's32[2]{0}', space=sflag, size = 0x8, scoped, tag = 'scoped memory for tpu_custom_call.1']
    #allocation4 [shape = 'u8[1024]{0}', space=vmem, size = 0x400, scoped, tag = 'output window, operand 1']
    #allocation5 [shape = 's32[2]{0}', space=sflag, size = 0x8, scoped, tag = 'scoped memory for tpu_custom_call.1']
    #allocation6 [shape = 'u8[1024]{0}', space=vmem, size = 0x400, scoped, tag = 'output window, operand 2']
    %12 = vsyncpa [#allocation3], 0
    %s13 = scalar_lea.sflag [#allocation3], 1
    %14 = vsyncpa %s13, 0
    %15 = vsyncpa [#allocation5], 0
    %s16 = scalar_lea.sflag [#allocation5], 1
    %17 = vsyncpa %s16, 0
    loop: start=0, step=1, limit=6
    $region2: #{tpu_custom_call.1} parent=1 // loop_pre_header
      _
    $region3: #{tpu_custom_call.1} parent=1 // loop_header
      %s19 = sphi 0, %s23
      %p20 = scmp.ge.s32.totalorder %s19, 6
      %s26 = sphi 0, %s38
      %s27 = sphi 0, %s34
      %s28 = sphi 0, %s26
      %s29 = sphi 0, %s27
      %s30 = sphi 0, %s28
      %s31 = sphi 0, %s29
      %s43 = sphi 0, %s45
      %s46 = sphi 0, %s43
      %s47 = sphi 0, %s46
      %s63 = sphi 0, %s47
      %s75 = sphi 0, %s77
      %s78 = sphi 0, %s75
      %s79 = sphi 0, %s78
      %s95 = sphi 0, %s79
      %s99 = sphi 0, %s99
      %s101 = sphi 0, %s99
      %s102 = sphi 0, %s101
      %s116 = sphi 0, %s102
      %s120 = sphi 0, %s120
      %s122 = sphi 0, %s120
      %s123 = sphi 0, %s122
      %s137 = sphi 0, %s123
      %s145 = sphi 0, %s147
      %s148 = sphi 0, %s145
      %s149 = sphi 0, %s148
      %s165 = sphi 0, %s149
      %s173 = sphi 0, %s175
      %s176 = sphi 0, %s173
      %s177 = sphi 0, %s176
      %s193 = sphi 0, %s177
      %s201 = sphi 0, %s203
      %s204 = sphi 0, %s201
      %s205 = sphi 0, %s204
      %s221 = sphi 0, %s205
    $region4: #{tpu_custom_call.1} parent=1 // loop_header_branch
      %22 = sbr.rel (%p20) target = $region8
    $region5: #{tpu_custom_call.1} parent=1 // loop_body
      %s24 = ssub.s32 %s19, 1
      %s25 = ssub.s32 %s19, 2
      %s32 = sadd.s32 1, %s27
      %p33 = scmp.ge.s32.totalorder %s32, 2
      %s34 = scalar_select %p33, 0, %s32
      %s35 = sadd.s32 1, %s26
      %s36 = scalar_select %p33, %s35, %s26
      %p37 = scmp.ge.s32.totalorder %s36, 2
      %s38 = scalar_select %p37, 0, %s36
      %s39 = ssub.s32 %s26, %s38
      %s40 = ssub.s32 %s27, %s34
      %s41 = sor.u32 %s39, %s40
      %p42 = scmp.eq.s32.totalorder %s41, 0
      %s44 = sadd.s32 %s43, 1
      %s45 = scalar_select %p42, %s43, %s44
      %p48 = pneg %p42
      %p49 = scmp.eq.s32.totalorder %s19, 3
      %p50 = por %p48, %p49
      %p51 = scmp.ne.s32.totalorder %s43, %s46
      %p52 = scmp.eq.s32.totalorder %s19, 0
      %p53 = por %p51, %p52
      %p54 = scmp.ne.s32.totalorder %s43, %s46
      %p55 = scmp.eq.s32.totalorder %s24, 3
      %p56 = por %p54, %p55
      %p57 = scmp.ne.s32.totalorder %s46, %s47
      %p58 = scmp.eq.s32.totalorder %s24, 0
      %p59 = por %p57, %p58
      %p60 = scmp.ne.s32.totalorder %s46, %s47
      %p61 = scmp.eq.s32.totalorder %s25, 3
      %p62 = por %p60, %p61
      %p64 = scmp.ne.s32.totalorder %s47, %s63
      %p65 = scmp.eq.s32.totalorder %s25, 0
      %p66 = por %p64, %p65
      %s67 = sadd.s32 %s27, 1
      %s68 = smul.u32 %s67, 8
      %s69 = sadd.s32 %s34, 1
      %s70 = smul.u32 %s69, 8
      %s71 = ssub.s32 %s26, %s38
      %s72 = ssub.s32 %s68, %s70
      %s73 = sor.u32 %s71, %s72
      %p74 = scmp.eq.s32.totalorder %s73, 0
      %s76 = sadd.s32 %s75, 1
      %s77 = scalar_select %p74, %s75, %s76
      %p80 = pneg %p74
      %p81 = scmp.eq.s32.totalorder %s19, 3
      %p82 = por %p80, %p81
      %p83 = scmp.ne.s32.totalorder %s75, %s78
      %p84 = scmp.eq.s32.totalorder %s19, 0
      %p85 = por %p83, %p84
      %p86 = scmp.ne.s32.totalorder %s75, %s78
      %p87 = scmp.eq.s32.totalorder %s24, 3
      %p88 = por %p86, %p87
      %p89 = scmp.ne.s32.totalorder %s78, %s79
      %p90 = scmp.eq.s32.totalorder %s24, 0
      %p91 = por %p89, %p90
      %p92 = scmp.ne.s32.totalorder %s78, %s79
      %p93 = scmp.eq.s32.totalorder %s25, 3
      %p94 = por %p92, %p93
      %p96 = scmp.ne.s32.totalorder %s79, %s95
      %p97 = scmp.eq.s32.totalorder %s25, 0
      %p98 = por %p96, %p97
      %s100 = sadd.s32 %s99, 1
      %p103 = scmp.eq.s32.totalorder %s19, 3
      %p104 = scmp.ne.s32.totalorder %s99, %s101
      %p105 = scmp.eq.s32.totalorder %s19, 0
      %p106 = por %p104, %p105
      %p107 = scmp.ne.s32.totalorder %s99, %s101
      %p108 = scmp.eq.s32.totalorder %s24, 3
      %p109 = por %p107, %p108
      %p110 = scmp.ne.s32.totalorder %s101, %s102
      %p111 = scmp.eq.s32.totalorder %s24, 0
      %p112 = por %p110, %p111
      %p113 = scmp.ne.s32.totalorder %s101, %s102
      %p114 = scmp.eq.s32.totalorder %s25, 3
      %p115 = por %p113, %p114
      %p117 = scmp.ne.s32.totalorder %s102, %s116
      %p118 = scmp.eq.s32.totalorder %s25, 0
      %p119 = por %p117, %p118
      %s121 = sadd.s32 %s120, 1
      %p124 = scmp.eq.s32.totalorder %s19, 3
      %p125 = scmp.ne.s32.totalorder %s120, %s122
      %p126 = scmp.eq.s32.totalorder %s19, 0
      %p127 = por %p125, %p126
      %p128 = scmp.ne.s32.totalorder %s120, %s122
      %p129 = scmp.eq.s32.totalorder %s24, 3
      %p130 = por %p128, %p129
      %p131 = scmp.ne.s32.totalorder %s122, %s123
      %p132 = scmp.eq.s32.totalorder %s24, 0
      %p133 = por %p131, %p132
      %p134 = scmp.ne.s32.totalorder %s122, %s123
      %p135 = scmp.eq.s32.totalorder %s25, 3
      %p136 = por %p134, %p135
      %p138 = scmp.ne.s32.totalorder %s123, %s137
      %p139 = scmp.eq.s32.totalorder %s25, 0
      %p140 = por %p138, %p139
      %s141 = ssub.s32 %s26, %s38
      %s142 = ssub.s32 %s27, %s34
      %s143 = sor.u32 %s141, %s142
      %p144 = scmp.eq.s32.totalorder %s143, 0
      %s146 = sadd.s32 %s145, 1
      %s147 = scalar_select %p144, %s145, %s146
      %p150 = pneg %p144
      %p151 = scmp.eq.s32.totalorder %s19, 3
      %p152 = por %p150, %p151
      %p153 = scmp.ne.s32.totalorder %s145, %s148
      %p154 = scmp.eq.s32.totalorder %s19, 0
      %p155 = por %p153, %p154
      %p156 = scmp.ne.s32.totalorder %s145, %s148
      %p157 = scmp.eq.s32.totalorder %s24, 3
      %p158 = por %p156, %p157
      %p159 = scmp.ne.s32.totalorder %s148, %s149
      %p160 = scmp.eq.s32.totalorder %s24, 0
      %p161 = por %p159, %p160
      %p162 = scmp.ne.s32.totalorder %s148, %s149
      %p163 = scmp.eq.s32.totalorder %s25, 3
      %p164 = por %p162, %p163
      %p166 = scmp.ne.s32.totalorder %s149, %s165
      %p167 = scmp.eq.s32.totalorder %s25, 0
      %p168 = por %p166, %p167
      %s169 = ssub.s32 %s26, %s38
      %s170 = ssub.s32 %s27, %s34
      %s171 = sor.u32 %s169, %s170
      %p172 = scmp.eq.s32.totalorder %s171, 0
      %s174 = sadd.s32 %s173, 1
      %s175 = scalar_select %p172, %s173, %s174
      %p178 = pneg %p172
      %p179 = scmp.eq.s32.totalorder %s19, 3
      %p180 = por %p178, %p179
      %p181 = scmp.ne.s32.totalorder %s173, %s176
      %p182 = scmp.eq.s32.totalorder %s19, 0
      %p183 = por %p181, %p182
      %p184 = scmp.ne.s32.totalorder %s173, %s176
      %p185 = scmp.eq.s32.totalorder %s24, 3
      %p186 = por %p184, %p185
      %p187 = scmp.ne.s32.totalorder %s176, %s177
      %p188 = scmp.eq.s32.totalorder %s24, 0
      %p189 = por %p187, %p188
      %p190 = scmp.ne.s32.totalorder %s176, %s177
      %p191 = scmp.eq.s32.totalorder %s25, 3
      %p192 = por %p190, %p191
      %p194 = scmp.ne.s32.totalorder %s177, %s193
      %p195 = scmp.eq.s32.totalorder %s25, 0
      %p196 = por %p194, %p195
      %s197 = ssub.s32 %s26, %s38
      %s198 = ssub.s32 %s27, %s34
      %s199 = sor.u32 %s197, %s198
      %p200 = scmp.eq.s32.totalorder %s199, 0
      %s202 = sadd.s32 %s201, 1
      %s203 = scalar_select %p200, %s201, %s202
      %p206 = pneg %p200
      %p207 = scmp.eq.s32.totalorder %s19, 3
      %p208 = por %p206, %p207
      %p209 = scmp.ne.s32.totalorder %s201, %s204
      %p210 = scmp.eq.s32.totalorder %s19, 0
      %p211 = por %p209, %p210
      %p212 = scmp.ne.s32.totalorder %s201, %s204
      %p213 = scmp.eq.s32.totalorder %s24, 3
      %p214 = por %p212, %p213
      %p215 = scmp.ne.s32.totalorder %s204, %s205
      %p216 = scmp.eq.s32.totalorder %s24, 0
      %p217 = por %p215, %p216
      %p218 = scmp.ne.s32.totalorder %s204, %s205
      %p219 = scmp.eq.s32.totalorder %s25, 3
      %p220 = por %p218, %p219
      %p222 = scmp.ne.s32.totalorder %s205, %s221
      %p223 = scmp.eq.s32.totalorder %s25, 0
      %p224 = por %p222, %p223
      %p225 = scmp.le.s32.totalorder 1, %s19
      %p226 = scmp.lt.s32.totalorder %s19, 5
      %p227 = pnand %p225, %p226
      %p228 = pneg %p227
      // Predicated region
      $region9: #{tpu_custom_call.1} parent=5 // pred_check
        _
      $region10: #{tpu_custom_call.1} parent=5 // pred_check_branch
        %230 = sbr.rel (%p227) target = $region12
      $region11: #{tpu_custom_call.1} parent=5 // pred_region
        %s231 = ssub.s32 %s19, 1
        // Predicated region
        $region13: #{tpu_custom_call.1} parent=11 // pred_check
          %p232 = pneg %p112
        $region14: #{tpu_custom_call.1} parent=11 // pred_check_branch
          %234 = sbr.rel (%p232) target = $region16
        $region15: #{tpu_custom_call.1} parent=11 // pred_region
          _
        $region16: #{tpu_custom_call.1} parent=11 // pred_fallthru
          _
        // Predicated region
        $region17: #{tpu_custom_call.1} parent=11 // pred_check
          %p235 = pneg %p133
        $region18: #{tpu_custom_call.1} parent=11 // pred_check_branch
          %237 = sbr.rel (%p235) target = $region20
        $region19: #{tpu_custom_call.1} parent=11 // pred_region
          _
        $region20: #{tpu_custom_call.1} parent=11 // pred_fallthru
          _
      $region12: #{tpu_custom_call.1} parent=5 // pred_fallthru
        _
      %p238 = scmp.lt.s32.totalorder %s19, 4
      // Predicated region
      $region21: #{tpu_custom_call.1} parent=5 // pred_check
        %p239 = pneg %p238
      $region22: #{tpu_custom_call.1} parent=5 // pred_check_branch
        %241 = sbr.rel (%p239) target = $region24
      $region23: #{tpu_custom_call.1} parent=5 // pred_region
        // Predicated region
        $region25: #{tpu_custom_call.1} parent=23 // pred_check
          %p242 = pneg %p53
        $region26: #{tpu_custom_call.1} parent=23 // pred_check_branch
          %244 = sbr.rel (%p242) target = $region28
        $region27: #{tpu_custom_call.1} parent=23 // pred_region
          %s245 = smul.u32 8, %s27
          %s246 = ssub.s32 17, %s245
          %p247 = scmp.lt.s32.totalorder %s246, 8
          %s248 = scalar_select %p247, %s246, 8
          %s249 = smul.u32 128, %s248
          %s250 = smul.u32 %s249, 3
          %p251 = scmp.lt.s32.totalorder %s26, 1
          %s252 = scalar_select %p251, %s26, 1
          %p253 = scmp.lt.s32.totalorder %s245, 16
          %s254 = scalar_select %p253, %s245, 16
          %s255 = smul.addr %s254, 3
          %s256 = smul.addr %s252, 51
          %s257 = sadd.s32 %s255, %s256
          %s258 = smul.addr %s257, 8
          %s259 = scalar_lea.vmem %s0, %s258
          %s260 = smul.u32 8, %s27
          %s261 = ssub.s32 17, %s260
          %p262 = scmp.lt.s32.totalorder %s261, 8
          %s263 = scalar_select %p262, %s261, 8
          %s264 = smul.u32 128, %s263
          %s265 = smul.u32 %s264, 3
        $region28: #{tpu_custom_call.1} parent=23 // pred_fallthru
          _
        // Predicated region
        $region29: #{tpu_custom_call.1} parent=23 // pred_check
          %p266 = pneg %p85
        $region30: #{tpu_custom_call.1} parent=23 // pred_check_branch
          %268 = sbr.rel (%p266) target = $region32
        $region31: #{tpu_custom_call.1} parent=23 // pred_region
          %s269 = sadd.s32 %s27, 1
          %s270 = smul.u32 %s269, 8
          %p271 = scmp.lt.s32.totalorder %s26, 1
          %s272 = scalar_select %p271, %s26, 1
          %p273 = scmp.lt.s32.totalorder %s270, 16
          %s274 = scalar_select %p273, %s270, 16
          %s275 = smul.addr %s274, 3
          %s276 = smul.addr %s272, 51
          %s277 = sadd.s32 %s275, %s276
          %s278 = smul.addr %s277, 8
          %s279 = scalar_lea.vmem %s1, %s278
          %s280 = sadd.s32 %s27, 1
          %s281 = smul.u32 %s280, 8
        $region32: #{tpu_custom_call.1} parent=23 // pred_fallthru
          _
      $region24: #{tpu_custom_call.1} parent=5 // pred_fallthru
        _
      %p282 = scmp.le.s32.totalorder 1, %s19
      %p283 = scmp.lt.s32.totalorder %s19, 5
      %p284 = pnand %p282, %p283
      %p285 = pneg %p284
      // Predicated region
      $region33: #{tpu_custom_call.1} parent=5 // pred_check
        _
      $region34: #{tpu_custom_call.1} parent=5 // pred_check_branch
        %287 = sbr.rel (%p284) target = $region36
      $region35: #{tpu_custom_call.1} parent=5 // pred_region
        %s288 = ssub.s32 %s19, 1
        %s289 = smul.u32 8, %s29
        %s290 = ssub.s32 17, %s289
        %p291 = scmp.lt.s32.totalorder %s290, 8
        %s292 = scalar_select %p291, %s290, 8
        %s293 = smul.u32 128, %s292
        %s294 = smul.u32 %s293, 3
        %p295 = scmp.lt.s32.totalorder %s28, 1
        %s296 = scalar_select %p295, %s28, 1
        %p297 = scmp.lt.s32.totalorder %s289, 16
        %s298 = scalar_select %p297, %s289, 16
        %s299 = smul.addr %s298, 3
        %s300 = smul.addr %s296, 51
        %s301 = sadd.s32 %s299, %s300
        %s302 = smul.addr %s301, 8
        %s303 = scalar_lea.vmem %s0, %s302
        %p304 = pneg %p59
        %p305 = pneg %p56
        %s306 = sadd.s32 %s29, 1
        %s307 = smul.u32 %s306, 8
        %p308 = scmp.lt.s32.totalorder %s28, 1
        %s309 = scalar_select %p308, %s28, 1
        %p310 = scmp.lt.s32.totalorder %s307, 16
        %s311 = scalar_select %p310, %s307, 16
        %s312 = smul.addr %s311, 3
        %s313 = smul.addr %s309, 51
        %s314 = sadd.s32 %s312, %s313
        %s315 = smul.addr %s314, 8
        %s316 = scalar_lea.vmem %s1, %s315
        %p317 = pneg %p91
        %p318 = pneg %p88
        %p319 = pneg %p112
        %p320 = pneg %p109
        %p321 = pneg %p133
        %p322 = pneg %p130
        %p323 = pneg %p161
        %p324 = pneg %p158
        %s325 = sand.u32 %s148, 1
        %s326 = scalar_lea.sflag [#allocation3], %s325
        %s327 = sand.u32 %s148, 1
        %s328 = smul.addr %s327, 128
        %s329 = scalar_lea.vmem [#allocation2], %s328
        %p330 = pneg %p189
        %p331 = pneg %p186
        %s332 = sand.u32 %s24, 1
        %s333 = scalar_lea.sflag [#allocation5], %s332
        %s334 = sand.u32 %s176, 1
        %s335 = scalar_lea.vmem [#allocation4], %s334
        %p336 = pneg %p217
        %p337 = pneg %p214
        %s338 = sand.u32 %s24, 1
        %s339 = scalar_lea.sflag [#allocation5], %s338
        %s340 = sand.u32 %s204, 1
        %s341 = scalar_lea.vmem [#allocation6], %s340
        %s342 = smul.u32 8, %s29
        %s343 = ssub.s32 17, %s342
        %p344 = scmp.lt.s32.totalorder %s343, 8
        %s345 = scalar_select %p344, %s343, 8
        %s346 = smul.u32 128, %s345
        %s347 = smul.u32 %s346, 3
        %p348 = scmp.lt.s32.totalorder %s28, 1
        %s349 = scalar_select %p348, %s28, 1
        %p350 = scmp.lt.s32.totalorder %s342, 16
        %s351 = scalar_select %p350, %s342, 16
        %s352 = smul.addr %s351, 3
        %s353 = smul.addr %s349, 51
        %s354 = sadd.s32 %s352, %s353
        %s355 = smul.addr %s354, 8
        %s356 = scalar_lea.vmem %s0, %s355
        %s357 = smul.u32 8, %s29
        %s358 = ssub.s32 17, %s357
        %p359 = scmp.lt.s32.totalorder %s358, 8
        %s360 = scalar_select %p359, %s358, 8
        %s361 = smul.u32 128, %s360
        %s362 = smul.u32 %s361, 3
        %s363 = sadd.s32 %s29, 1
        %s364 = smul.u32 %s363, 8
        %p365 = scmp.lt.s32.totalorder %s28, 1
        %s366 = scalar_select %p365, %s28, 1
        %p367 = scmp.lt.s32.totalorder %s364, 16
        %s368 = scalar_select %p367, %s364, 16
        %s369 = smul.addr %s368, 3
        %s370 = smul.addr %s366, 51
        %s371 = sadd.s32 %s369, %s370
        %s372 = smul.addr %s371, 8
        %s373 = scalar_lea.vmem %s1, %s372
        %s374 = sadd.s32 %s29, 1
        %s375 = smul.u32 %s374, 8
        %s376 = smul.u32 8, %s29
        %v377 = vld [vmem:[%s356] sm:$0xff]
        %v378 = vld [vmem:[%s356 + $0x8] sm:$0xff]
        %v379 = vld [vmem:[%s356 + $0x10] sm:$0x1]
        %v380 = vld [vmem:[%s356 + $0x18] sm:$0xff]
        %v381 = vld [vmem:[%s356 + $0x20] sm:$0xff]
        %v382 = vld [vmem:[%s356 + $0x28] sm:$0x1]
        %v383 = vld [vmem:[%s356 + $0x30] sm:$0xff]
        %v384 = vld [vmem:[%s356 + $0x38] sm:$0xff]
        %v385 = vld [vmem:[%s356 + $0x40] sm:$0x1]
        %v386 = vld [vmem:[%s356 + $0x48] sm:$0xff]
        %v387 = vld [vmem:[%s356 + $0x50] sm:$0xff]
        %v388 = vld [vmem:[%s356 + $0x58] sm:$0x1]
        %v389 = vld [vmem:[%s356 + $0x60] sm:$0xff]
        %v390 = vld [vmem:[%s356 + $0x68] sm:$0xff]
        %v391 = vld [vmem:[%s356 + $0x70] sm:$0x1]
        %v392 = vld [vmem:[%s356 + $0x78] sm:$0xff]
        %v393 = vld [vmem:[%s356 + $0x80] sm:$0xff]
        %v394 = vld [vmem:[%s356 + $0x88] sm:$0x1]
        %v395 = vld [vmem:[%s356 + $0x90] sm:$0xff]
        %v396 = vld [vmem:[%s356 + $0x98] sm:$0xff]
        %v397 = vld [vmem:[%s356 + $0xa0] sm:$0x1]
        %v398 = vld [vmem:[%s356 + $0xa8] sm:$0xff]
        %v399 = vld [vmem:[%s356 + $0xb0] sm:$0xff]
        %v400 = vld [vmem:[%s356 + $0xb8] sm:$0x1]
        %v401 = vld [vmem:[%s373] sm:$0xff]
        %v402 = vld [vmem:[%s373 + $0x8] sm:$0xff]
        %v403 = vld [vmem:[%s373 + $0x10] sm:$0x1]
        %vm428 = vcmask 1046528
        %v429 = vrot.slane %v377, 1
        %v430 = vrot.slane %v378, 1
        %v431 = vsel %vm428, %v429, %v430
        %v432 = vrot.slane %v379, 1
        %v433 = vsel %vm428, %v430, %v432
        %v434 = vrot.slane %v380, 1
        %v435 = vrot.slane %v381, 1
        %v436 = vsel %vm428, %v434, %v435
        %v437 = vrot.slane %v382, 1
        %v438 = vsel %vm428, %v435, %v437
        %v439 = vrot.slane %v383, 1
        %v440 = vrot.slane %v384, 1
        %v441 = vsel %vm428, %v439, %v440
        %v442 = vrot.slane %v385, 1
        %v443 = vsel %vm428, %v440, %v442
        %v444 = vrot.slane %v386, 1
        %v445 = vrot.slane %v387, 1
        %v446 = vsel %vm428, %v444, %v445
        %v447 = vrot.slane %v388, 1
        %v448 = vsel %vm428, %v445, %v447
        %v449 = vrot.slane %v389, 1
        %v450 = vrot.slane %v390, 1
        %v451 = vsel %vm428, %v449, %v450
        %v452 = vrot.slane %v391, 1
        %v453 = vsel %vm428, %v450, %v452
        %v454 = vrot.slane %v392, 1
        %v455 = vrot.slane %v393, 1
        %v456 = vsel %vm428, %v454, %v455
        %v457 = vrot.slane %v394, 1
        %v458 = vsel %vm428, %v455, %v457
        %v459 = vrot.slane %v395, 1
        %v460 = vrot.slane %v396, 1
        %v461 = vsel %vm428, %v459, %v460
        %v462 = vrot.slane %v397, 1
        %v463 = vsel %vm428, %v460, %v462
        %v464 = vrot.slane %v398, 1
        %v465 = vrot.slane %v399, 1
        %v466 = vsel %vm428, %v464, %v465
        %v467 = vrot.slane %v400, 1
        %v468 = vsel %vm428, %v465, %v467
        %v472 = vrot.slane %v401, 1
        %v473 = vrot.slane %v402, 1
        %v474 = vsel %vm428, %v472, %v473
        %v475 = vrot.slane %v403, 1
        %v476 = vsel %vm428, %v473, %v475
        %v477 = vld [vmem:[%s2] sm:$0xf]
        %s478 = scalar_lea.vmem %s2, 4
        %v479 = vld [vmem:[%s478] sm:$0xf]
        %vm480 = vcmask 31744
        %v481 = vsel %vm480, %v431, 0
        %v483 = vsel %vm480, %v433, 0
        %v485 = vsel %vm480, %v436, 0
        %v487 = vsel %vm480, %v438, 0
        %v489 = vsel %vm480, %v441, 0
        %v491 = vsel %vm480, %v443, 0
        %v493 = vsel %vm480, %v446, 0
        %v495 = vsel %vm480, %v448, 0
        %v497 = vsel %vm480, %v451, 0
        %v499 = vsel %vm480, %v453, 0
        %v501 = vsel %vm480, %v456, 0
        %v503 = vsel %vm480, %v458, 0
        %v505 = vsel %vm480, %v461, 0
        %v507 = vsel %vm480, %v463, 0
        %v509 = vsel %vm480, %v466, 0
        %v511 = vsel %vm480, %v468, 0
        %vm513 = vcmask 1043456
        %v515 = vsel %vm513, %v479, 0
        %517 = vmatprep.subr.mxu0 0.0
        %518 = vmatpush1.msra.mxu0 0.0
        %519 = vmatprep.subr.mxu0 0.0
        %520 = vmatpush1.msra.mxu0 0.0
        %521 = vmatprep.subr.mxu0 0.0
        %522 = vmatpush1.msra.mxu0 0.0
        %523 = vmatprep.subr.mxu0 0.0
        %524 = vmatpush1.msra.mxu0 0.0
        %525 = vmatprep.subr.mxu0 0.0
        %526 = vmatpush1.msra.mxu0 0.0
        %527 = vmatprep.subr.mxu0 0.0
        %528 = vmatpush1.msra.mxu0 0.0
        %529 = vmatprep.subr.mxu0 0.0
        %530 = vmatpush1.msra.mxu0 0.0
        %531 = vmatprep.subr.mxu0 0.0
        %532 = vmatpush1.msra.mxu0 0.0
        %533 = vmatprep.subr.mxu0 0.0
        %534 = vmatpush1.msra.mxu0 0.0
        %535 = vmatprep.subr.mxu0 0.0
        %536 = vmatpush1.msra.mxu0 0.0
        %537 = vmatprep.subr.mxu0 0.0
        %538 = vmatpush1.msra.mxu0 0.0
        %539 = vmatprep.subr.mxu0 0.0
        %540 = vmatpush1.msra.mxu0 0.0
        %541 = vmatprep.subr.mxu0 0.0
        %542 = vmatpush1.msra.mxu0 0.0
        %543 = vmatprep.subr.mxu0 0.0
        %544 = vmatpush1.msra.mxu0 0.0
        %545 = vmatprep.subr.mxu0 0.0
        %546 = vmatpush1.msra.mxu0 0.0
        %547 = vmatprep.subr.mxu0 0.0
        %548 = vmatpush1.msra.mxu0 %v515
        %549 = vmatprep.subr.mxu0 0.0
        %550 = vmatpush2.msra.mxu0 0.0
        %551 = vmatprep.subr.mxu0 0.0
        %552 = vmatpush2.msra.mxu0 0.0
        %553 = vmatprep.subr.mxu0 0.0
        %554 = vmatpush2.msra.mxu0 0.0
        %555 = vmatprep.subr.mxu0 0.0
        %556 = vmatpush2.msra.mxu0 0.0
        %557 = vmatprep.subr.mxu0 0.0
        %558 = vmatpush2.msra.mxu0 0.0
        %559 = vmatprep.subr.mxu0 0.0
        %560 = vmatpush2.msra.mxu0 0.0
        %561 = vmatprep.subr.mxu0 0.0
        %562 = vmatpush2.msra.mxu0 0.0
        %563 = vmatprep.subr.mxu0 0.0
        %564 = vmatpush2.msra.mxu0 0.0
        %565 = vmatprep.subr.mxu0 0.0
        %566 = vmatpush2.msra.mxu0 0.0
        %567 = vmatprep.subr.mxu0 0.0
        %568 = vmatpush2.msra.mxu0 0.0
        %569 = vmatprep.subr.mxu0 0.0
        %570 = vmatpush2.msra.mxu0 0.0
        %571 = vmatprep.subr.mxu0 0.0
        %572 = vmatpush2.msra.mxu0 0.0
        %573 = vmatprep.subr.mxu0 0.0
        %574 = vmatpush2.msra.mxu0 0.0
        %575 = vmatprep.subr.mxu0 0.0
        %576 = vmatpush2.msra.mxu0 0.0
        %577 = vmatprep.subr.mxu0 0.0
        %578 = vmatpush2.msra.mxu0 0.0
        %579 = vmatprep.subr.mxu0 0.0
        %580 = vmatpush2.msra.mxu0 0.0
        %581 = vmatprep.mubr.f32.mxu0 0.0
        %582 = vmatmul.mubr.f32.gmra.mxu0 %v481
        %v583 = vpop.f32.mrf.mxu0
        %v584 = vadd.f32 0.0, %v583
        %v585 = vpop.f32.mrf.mxu0
        %586 = vmatprep.mubr.f32.mxu0 0.0
        %587 = vmatmul.mubr.f32.gmra.mxu0 %v483
        %v588 = vpop.f32.mrf.mxu0
        %v589 = vadd.f32 0.0, %v588
        %v590 = vpop.f32.mrf.mxu0
        %591 = vmatprep.mubr.f32.mxu0 0.0
        %592 = vmatmul.mubr.f32.gmra.mxu0 %v485
        %v593 = vpop.f32.mrf.mxu0
        %v594 = vadd.f32 0.0, %v593
        %v595 = vpop.f32.mrf.mxu0
        %596 = vmatprep.mubr.f32.mxu0 0.0
        %597 = vmatmul.mubr.f32.gmra.mxu0 %v487
        %v598 = vpop.f32.mrf.mxu0
        %v599 = vadd.f32 0.0, %v598
        %v600 = vpop.f32.mrf.mxu0
        %601 = vmatprep.mubr.f32.mxu0 0.0
        %602 = vmatmul.mubr.f32.gmra.mxu0 %v489
        %v603 = vpop.f32.mrf.mxu0
        %v604 = vadd.f32 0.0, %v603
        %v605 = vpop.f32.mrf.mxu0
        %606 = vmatprep.mubr.f32.mxu0 0.0
        %607 = vmatmul.mubr.f32.gmra.mxu0 %v491
        %v608 = vpop.f32.mrf.mxu0
        %v609 = vadd.f32 0.0, %v608
        %v610 = vpop.f32.mrf.mxu0
        %611 = vmatprep.mubr.f32.mxu0 0.0
        %612 = vmatmul.mubr.f32.gmra.mxu0 %v493
        %v613 = vpop.f32.mrf.mxu0
        %v614 = vadd.f32 0.0, %v613
        %v615 = vpop.f32.mrf.mxu0
        %616 = vmatprep.mubr.f32.mxu0 0.0
        %617 = vmatmul.mubr.f32.gmra.mxu0 %v495
        %v618 = vpop.f32.mrf.mxu0
        %v619 = vadd.f32 0.0, %v618
        %v620 = vpop.f32.mrf.mxu0
        %621 = vmatprep.mubr.f32.mxu0 0.0
        %622 = vmatmul.mubr.f32.gmra.mxu0 %v497
        %v623 = vpop.f32.mrf.mxu0
        %v624 = vadd.f32 0.0, %v623
        %v625 = vpop.f32.mrf.mxu0
        %626 = vmatprep.mubr.f32.mxu0 0.0
        %627 = vmatmul.mubr.f32.gmra.mxu0 %v499
        %v628 = vpop.f32.mrf.mxu0
        %v629 = vadd.f32 0.0, %v628
        %v630 = vpop.f32.mrf.mxu0
        %631 = vmatprep.mubr.f32.mxu0 0.0
        %632 = vmatmul.mubr.f32.gmra.mxu0 %v501
        %v633 = vpop.f32.mrf.mxu0
        %v634 = vadd.f32 0.0, %v633
        %v635 = vpop.f32.mrf.mxu0
        %636 = vmatprep.mubr.f32.mxu0 0.0
        %637 = vmatmul.mubr.f32.gmra.mxu0 %v503
        %v638 = vpop.f32.mrf.mxu0
        %v639 = vadd.f32 0.0, %v638
        %v640 = vpop.f32.mrf.mxu0
        %641 = vmatprep.mubr.f32.mxu0 0.0
        %642 = vmatmul.mubr.f32.gmra.mxu0 %v505
        %v643 = vpop.f32.mrf.mxu0
        %v644 = vadd.f32 0.0, %v643
        %v645 = vpop.f32.mrf.mxu0
        %646 = vmatprep.mubr.f32.mxu0 0.0
        %647 = vmatmul.mubr.f32.gmra.mxu0 %v507
        %v648 = vpop.f32.mrf.mxu0
        %v649 = vadd.f32 0.0, %v648
        %v650 = vpop.f32.mrf.mxu0
        %651 = vmatprep.mubr.f32.mxu0 0.0
        %652 = vmatmul.mubr.f32.gmra.mxu0 %v509
        %v653 = vpop.f32.mrf.mxu0
        %v654 = vadd.f32 0.0, %v653
        %v655 = vpop.f32.mrf.mxu0
        %656 = vmatprep.mubr.f32.mxu0 0.0
        %657 = vmatmul.mubr.f32.gmra.mxu0 %v511
        %v658 = vpop.f32.mrf.mxu0
        %v659 = vadd.f32 0.0, %v658
        %v660 = vpop.f32.mrf.mxu0
        %661 = vdwg.mxu0
        %v662 = vsel %vm480, %v377, 0
        %v664 = vsel %vm480, %v378, 0
        %v666 = vsel %vm480, %v380, 0
        %v668 = vsel %vm480, %v381, 0
        %v670 = vsel %vm480, %v383, 0
        %v672 = vsel %vm480, %v384, 0
        %v674 = vsel %vm480, %v386, 0
        %v676 = vsel %vm480, %v387, 0
        %v678 = vsel %vm480, %v389, 0
        %v680 = vsel %vm480, %v390, 0
        %v682 = vsel %vm480, %v392, 0
        %v684 = vsel %vm480, %v393, 0
        %v686 = vsel %vm480, %v395, 0
        %v688 = vsel %vm480, %v396, 0
        %v690 = vsel %vm480, %v398, 0
        %v692 = vsel %vm480, %v399, 0
        %v695 = vsel %vm513, %v477, 0
        %697 = vmatprep.subr.mxu0 0.0
        %698 = vmatpush1.msra.mxu0 0.0
        %699 = vmatprep.subr.mxu0 0.0
        %700 = vmatpush1.msra.mxu0 0.0
        %701 = vmatprep.subr.mxu0 0.0
        %702 = vmatpush1.msra.mxu0 0.0
        %703 = vmatprep.subr.mxu0 0.0
        %704 = vmatpush1.msra.mxu0 0.0
        %705 = vmatprep.subr.mxu0 0.0
        %706 = vmatpush1.msra.mxu0 0.0
        %707 = vmatprep.subr.mxu0 0.0
        %708 = vmatpush1.msra.mxu0 0.0
        %709 = vmatprep.subr.mxu0 0.0
        %710 = vmatpush1.msra.mxu0 0.0
        %711 = vmatprep.subr.mxu0 0.0
        %712 = vmatpush1.msra.mxu0 0.0
        %713 = vmatprep.subr.mxu0 0.0
        %714 = vmatpush1.msra.mxu0 0.0
        %715 = vmatprep.subr.mxu0 0.0
        %716 = vmatpush1.msra.mxu0 0.0
        %717 = vmatprep.subr.mxu0 0.0
        %718 = vmatpush1.msra.mxu0 0.0
        %719 = vmatprep.subr.mxu0 0.0
        %720 = vmatpush1.msra.mxu0 0.0
        %721 = vmatprep.subr.mxu0 0.0
        %722 = vmatpush1.msra.mxu0 0.0
        %723 = vmatprep.subr.mxu0 0.0
        %724 = vmatpush1.msra.mxu0 0.0
        %725 = vmatprep.subr.mxu0 0.0
        %726 = vmatpush1.msra.mxu0 0.0
        %727 = vmatprep.subr.mxu0 0.0
        %728 = vmatpush1.msra.mxu0 %v695
        %729 = vmatprep.subr.mxu0 0.0
        %730 = vmatpush2.msra.mxu0 0.0
        %731 = vmatprep.subr.mxu0 0.0
        %732 = vmatpush2.msra.mxu0 0.0
        %733 = vmatprep.subr.mxu0 0.0
        %734 = vmatpush2.msra.mxu0 0.0
        %735 = vmatprep.subr.mxu0 0.0
        %736 = vmatpush2.msra.mxu0 0.0
        %737 = vmatprep.subr.mxu0 0.0
        %738 = vmatpush2.msra.mxu0 0.0
        %739 = vmatprep.subr.mxu0 0.0
        %740 = vmatpush2.msra.mxu0 0.0
        %741 = vmatprep.subr.mxu0 0.0
        %742 = vmatpush2.msra.mxu0 0.0
        %743 = vmatprep.subr.mxu0 0.0
        %744 = vmatpush2.msra.mxu0 0.0
        %745 = vmatprep.subr.mxu0 0.0
        %746 = vmatpush2.msra.mxu0 0.0
        %747 = vmatprep.subr.mxu0 0.0
        %748 = vmatpush2.msra.mxu0 0.0
        %749 = vmatprep.subr.mxu0 0.0
        %750 = vmatpush2.msra.mxu0 0.0
        %751 = vmatprep.subr.mxu0 0.0
        %752 = vmatpush2.msra.mxu0 0.0
        %753 = vmatprep.subr.mxu0 0.0
        %754 = vmatpush2.msra.mxu0 0.0
        %755 = vmatprep.subr.mxu0 0.0
        %756 = vmatpush2.msra.mxu0 0.0
        %757 = vmatprep.subr.mxu0 0.0
        %758 = vmatpush2.msra.mxu0 0.0
        %759 = vmatprep.subr.mxu0 0.0
        %760 = vmatpush2.msra.mxu0 0.0
        %761 = vmatprep.mubr.f32.mxu0 0.0
        %762 = vmatmul.mubr.f32.gmra.mxu0 %v662
        %v763 = vpop.f32.mrf.mxu0
        %v764 = vadd.f32 %v584, %v763
        %v765 = vpop.f32.mrf.mxu0
        %766 = vmatprep.mubr.f32.mxu0 0.0
        %767 = vmatmul.mubr.f32.gmra.mxu0 %v664
        %v768 = vpop.f32.mrf.mxu0
        %v769 = vadd.f32 %v589, %v768
        %v770 = vpop.f32.mrf.mxu0
        %771 = vmatprep.mubr.f32.mxu0 0.0
        %772 = vmatmul.mubr.f32.gmra.mxu0 %v666
        %v773 = vpop.f32.mrf.mxu0
        %v774 = vadd.f32 %v594, %v773
        %v775 = vpop.f32.mrf.mxu0
        %776 = vmatprep.mubr.f32.mxu0 0.0
        %777 = vmatmul.mubr.f32.gmra.mxu0 %v668
        %v778 = vpop.f32.mrf.mxu0
        %v779 = vadd.f32 %v599, %v778
        %v780 = vpop.f32.mrf.mxu0
        %781 = vmatprep.mubr.f32.mxu0 0.0
        %782 = vmatmul.mubr.f32.gmra.mxu0 %v670
        %v783 = vpop.f32.mrf.mxu0
        %v784 = vadd.f32 %v604, %v783
        %v785 = vpop.f32.mrf.mxu0
        %786 = vmatprep.mubr.f32.mxu0 0.0
        %787 = vmatmul.mubr.f32.gmra.mxu0 %v672
        %v788 = vpop.f32.mrf.mxu0
        %v789 = vadd.f32 %v609, %v788
        %v790 = vpop.f32.mrf.mxu0
        %791 = vmatprep.mubr.f32.mxu0 0.0
        %792 = vmatmul.mubr.f32.gmra.mxu0 %v674
        %v793 = vpop.f32.mrf.mxu0
        %v794 = vadd.f32 %v614, %v793
        %v795 = vpop.f32.mrf.mxu0
        %796 = vmatprep.mubr.f32.mxu0 0.0
        %797 = vmatmul.mubr.f32.gmra.mxu0 %v676
        %v798 = vpop.f32.mrf.mxu0
        %v799 = vadd.f32 %v619, %v798
        %v800 = vpop.f32.mrf.mxu0
        %801 = vmatprep.mubr.f32.mxu0 0.0
        %802 = vmatmul.mubr.f32.gmra.mxu0 %v678
        %v803 = vpop.f32.mrf.mxu0
        %v804 = vadd.f32 %v624, %v803
        %v805 = vpop.f32.mrf.mxu0
        %806 = vmatprep.mubr.f32.mxu0 0.0
        %807 = vmatmul.mubr.f32.gmra.mxu0 %v680
        %v808 = vpop.f32.mrf.mxu0
        %v809 = vadd.f32 %v629, %v808
        %v810 = vpop.f32.mrf.mxu0
        %811 = vmatprep.mubr.f32.mxu0 0.0
        %812 = vmatmul.mubr.f32.gmra.mxu0 %v682
        %v813 = vpop.f32.mrf.mxu0
        %v814 = vadd.f32 %v634, %v813
        %v815 = vpop.f32.mrf.mxu0
        %816 = vmatprep.mubr.f32.mxu0 0.0
        %817 = vmatmul.mubr.f32.gmra.mxu0 %v684
        %v818 = vpop.f32.mrf.mxu0
        %v819 = vadd.f32 %v639, %v818
        %v820 = vpop.f32.mrf.mxu0
        %821 = vmatprep.mubr.f32.mxu0 0.0
        %822 = vmatmul.mubr.f32.gmra.mxu0 %v686
        %v823 = vpop.f32.mrf.mxu0
        %v824 = vadd.f32 %v644, %v823
        %v825 = vpop.f32.mrf.mxu0
        %826 = vmatprep.mubr.f32.mxu0 0.0
        %827 = vmatmul.mubr.f32.gmra.mxu0 %v688
        %v828 = vpop.f32.mrf.mxu0
        %v829 = vadd.f32 %v649, %v828
        %v830 = vpop.f32.mrf.mxu0
        %831 = vmatprep.mubr.f32.mxu0 0.0
        %832 = vmatmul.mubr.f32.gmra.mxu0 %v690
        %v833 = vpop.f32.mrf.mxu0
        %v834 = vadd.f32 %v654, %v833
        %v835 = vpop.f32.mrf.mxu0
        %836 = vmatprep.mubr.f32.mxu0 0.0
        %837 = vmatmul.mubr.f32.gmra.mxu0 %v692
        %v838 = vpop.f32.mrf.mxu0
        %v839 = vadd.f32 %v659, %v838
        %v840 = vpop.f32.mrf.mxu0
        %841 = vdwg.mxu0
        %s842 = scalar_lea.vmem %s2, 8
        %v843 = vld [vmem:[%s842] sm:$0xf]
        %v844 = vsel %vm480, %v401, 0
        %v846 = vsel %vm480, %v402, 0
        %v849 = vsel %vm513, %v843, 0
        %851 = vmatprep.subr.mxu0 0.0
        %852 = vmatpush1.msra.mxu0 0.0
        %853 = vmatprep.subr.mxu0 0.0
        %854 = vmatpush1.msra.mxu0 0.0
        %855 = vmatprep.subr.mxu0 0.0
        %856 = vmatpush1.msra.mxu0 0.0
        %857 = vmatprep.subr.mxu0 0.0
        %858 = vmatpush1.msra.mxu0 0.0
        %859 = vmatprep.subr.mxu0 0.0
        %860 = vmatpush1.msra.mxu0 0.0
        %861 = vmatprep.subr.mxu0 0.0
        %862 = vmatpush1.msra.mxu0 0.0
        %863 = vmatprep.subr.mxu0 0.0
        %864 = vmatpush1.msra.mxu0 0.0
        %865 = vmatprep.subr.mxu0 0.0
        %866 = vmatpush1.msra.mxu0 0.0
        %867 = vmatprep.subr.mxu0 0.0
        %868 = vmatpush1.msra.mxu0 0.0
        %869 = vmatprep.subr.mxu0 0.0
        %870 = vmatpush1.msra.mxu0 0.0
        %871 = vmatprep.subr.mxu0 0.0
        %872 = vmatpush1.msra.mxu0 0.0
        %873 = vmatprep.subr.mxu0 0.0
        %874 = vmatpush1.msra.mxu0 0.0
        %875 = vmatprep.subr.mxu0 0.0
        %876 = vmatpush1.msra.mxu0 0.0
        %877 = vmatprep.subr.mxu0 0.0
        %878 = vmatpush1.msra.mxu0 0.0
        %879 = vmatprep.subr.mxu0 0.0
        %880 = vmatpush1.msra.mxu0 0.0
        %881 = vmatprep.subr.mxu0 0.0
        %882 = vmatpush1.msra.mxu0 %v849
        %883 = vmatprep.subr.mxu0 0.0
        %884 = vmatpush2.msra.mxu0 0.0
        %885 = vmatprep.subr.mxu0 0.0
        %886 = vmatpush2.msra.mxu0 0.0
        %887 = vmatprep.subr.mxu0 0.0
        %888 = vmatpush2.msra.mxu0 0.0
        %889 = vmatprep.subr.mxu0 0.0
        %890 = vmatpush2.msra.mxu0 0.0
        %891 = vmatprep.subr.mxu0 0.0
        %892 = vmatpush2.msra.mxu0 0.0
        %893 = vmatprep.subr.mxu0 0.0
        %894 = vmatpush2.msra.mxu0 0.0
        %895 = vmatprep.subr.mxu0 0.0
        %896 = vmatpush2.msra.mxu0 0.0
        %897 = vmatprep.subr.mxu0 0.0
        %898 = vmatpush2.msra.mxu0 0.0
        %899 = vmatprep.subr.mxu0 0.0
        %900 = vmatpush2.msra.mxu0 0.0
        %901 = vmatprep.subr.mxu0 0.0
        %902 = vmatpush2.msra.mxu0 0.0
        %903 = vmatprep.subr.mxu0 0.0
        %904 = vmatpush2.msra.mxu0 0.0
        %905 = vmatprep.subr.mxu0 0.0
        %906 = vmatpush2.msra.mxu0 0.0
        %907 = vmatprep.subr.mxu0 0.0
        %908 = vmatpush2.msra.mxu0 0.0
        %909 = vmatprep.subr.mxu0 0.0
        %910 = vmatpush2.msra.mxu0 0.0
        %911 = vmatprep.subr.mxu0 0.0
        %912 = vmatpush2.msra.mxu0 0.0
        %913 = vmatprep.subr.mxu0 0.0
        %914 = vmatpush2.msra.mxu0 0.0
        %915 = vmatprep.mubr.f32.mxu0 0.0
        %916 = vmatmul.mubr.f32.gmra.mxu0 %v666
        %v917 = vpop.f32.mrf.mxu0
        %v918 = vadd.f32 0.0, %v917
        %v919 = vpop.f32.mrf.mxu0
        %920 = vmatprep.mubr.f32.mxu0 0.0
        %921 = vmatmul.mubr.f32.gmra.mxu0 %v668
        %v922 = vpop.f32.mrf.mxu0
        %v923 = vadd.f32 0.0, %v922
        %v924 = vpop.f32.mrf.mxu0
        %925 = vmatprep.mubr.f32.mxu0 0.0
        %926 = vmatmul.mubr.f32.gmra.mxu0 %v670
        %v927 = vpop.f32.mrf.mxu0
        %v928 = vadd.f32 0.0, %v927
        %v929 = vpop.f32.mrf.mxu0
        %930 = vmatprep.mubr.f32.mxu0 0.0
        %931 = vmatmul.mubr.f32.gmra.mxu0 %v672
        %v932 = vpop.f32.mrf.mxu0
        %v933 = vadd.f32 0.0, %v932
        %v934 = vpop.f32.mrf.mxu0
        %935 = vmatprep.mubr.f32.mxu0 0.0
        %936 = vmatmul.mubr.f32.gmra.mxu0 %v674
        %v937 = vpop.f32.mrf.mxu0
        %v938 = vadd.f32 0.0, %v937
        %v939 = vpop.f32.mrf.mxu0
        %940 = vmatprep.mubr.f32.mxu0 0.0
        %941 = vmatmul.mubr.f32.gmra.mxu0 %v676
        %v942 = vpop.f32.mrf.mxu0
        %v943 = vadd.f32 0.0, %v942
        %v944 = vpop.f32.mrf.mxu0
        %945 = vmatprep.mubr.f32.mxu0 0.0
        %946 = vmatmul.mubr.f32.gmra.mxu0 %v678
        %v947 = vpop.f32.mrf.mxu0
        %v948 = vadd.f32 0.0, %v947
        %v949 = vpop.f32.mrf.mxu0
        %950 = vmatprep.mubr.f32.mxu0 0.0
        %951 = vmatmul.mubr.f32.gmra.mxu0 %v680
        %v952 = vpop.f32.mrf.mxu0
        %v953 = vadd.f32 0.0, %v952
        %v954 = vpop.f32.mrf.mxu0
        %955 = vmatprep.mubr.f32.mxu0 0.0
        %956 = vmatmul.mubr.f32.gmra.mxu0 %v682
        %v957 = vpop.f32.mrf.mxu0
        %v958 = vadd.f32 0.0, %v957
        %v959 = vpop.f32.mrf.mxu0
        %960 = vmatprep.mubr.f32.mxu0 0.0
        %961 = vmatmul.mubr.f32.gmra.mxu0 %v684
        %v962 = vpop.f32.mrf.mxu0
        %v963 = vadd.f32 0.0, %v962
        %v964 = vpop.f32.mrf.mxu0
        %965 = vmatprep.mubr.f32.mxu0 0.0
        %966 = vmatmul.mubr.f32.gmra.mxu0 %v686
        %v967 = vpop.f32.mrf.mxu0
        %v968 = vadd.f32 0.0, %v967
        %v969 = vpop.f32.mrf.mxu0
        %970 = vmatprep.mubr.f32.mxu0 0.0
        %971 = vmatmul.mubr.f32.gmra.mxu0 %v688
        %v972 = vpop.f32.mrf.mxu0
        %v973 = vadd.f32 0.0, %v972
        %v974 = vpop.f32.mrf.mxu0
        %975 = vmatprep.mubr.f32.mxu0 0.0
        %976 = vmatmul.mubr.f32.gmra.mxu0 %v690
        %v977 = vpop.f32.mrf.mxu0
        %v978 = vadd.f32 0.0, %v977
        %v979 = vpop.f32.mrf.mxu0
        %980 = vmatprep.mubr.f32.mxu0 0.0
        %981 = vmatmul.mubr.f32.gmra.mxu0 %v692
        %v982 = vpop.f32.mrf.mxu0
        %v983 = vadd.f32 0.0, %v982
        %v984 = vpop.f32.mrf.mxu0
        %985 = vmatprep.mubr.f32.mxu0 0.0
        %986 = vmatmul.mubr.f32.gmra.mxu0 %v844
        %v987 = vpop.f32.mrf.mxu0
        %v988 = vadd.f32 0.0, %v987
        %v989 = vpop.f32.mrf.mxu0
        %990 = vmatprep.mubr.f32.mxu0 0.0
        %991 = vmatmul.mubr.f32.gmra.mxu0 %v846
        %v992 = vpop.f32.mrf.mxu0
        %v993 = vadd.f32 0.0, %v992
        %v994 = vpop.f32.mrf.mxu0
        %995 = vdwg.mxu0
        %v996 = vadd.f32 %v764, %v918
        %v997 = vadd.f32 %v769, %v923
        %v998 = vadd.f32 %v774, %v928
        %v999 = vadd.f32 %v779, %v933
        %v1000 = vadd.f32 %v784, %v938
        %v1001 = vadd.f32 %v789, %v943
        %v1002 = vadd.f32 %v794, %v948
        %v1003 = vadd.f32 %v799, %v953
        %v1004 = vadd.f32 %v804, %v958
        %v1005 = vadd.f32 %v809, %v963
        %v1006 = vadd.f32 %v814, %v968
        %v1007 = vadd.f32 %v819, %v973
        %v1008 = vadd.f32 %v824, %v978
        %v1009 = vadd.f32 %v829, %v983
        %v1010 = vadd.f32 %v834, %v988
        %v1011 = vadd.f32 %v839, %v993
        %s1012 = scalar_lea.vmem %s2, 12
        %v1013 = vld [vmem:[%s1012] sm:$0xf]
        %v1014 = vsel %vm480, %v474, 0
        %v1016 = vsel %vm480, %v476, 0
        %v1019 = vsel %vm513, %v1013, 0
        %1021 = vmatprep.subr.mxu0 0.0
        %1022 = vmatpush1.msra.mxu0 0.0
        %1023 = vmatprep.subr.mxu0 0.0
        %1024 = vmatpush1.msra.mxu0 0.0
        %1025 = vmatprep.subr.mxu0 0.0
        %1026 = vmatpush1.msra.mxu0 0.0
        %1027 = vmatprep.subr.mxu0 0.0
        %1028 = vmatpush1.msra.mxu0 0.0
        %1029 = vmatprep.subr.mxu0 0.0
        %1030 = vmatpush1.msra.mxu0 0.0
        %1031 = vmatprep.subr.mxu0 0.0
        %1032 = vmatpush1.msra.mxu0 0.0
        %1033 = vmatprep.subr.mxu0 0.0
        %1034 = vmatpush1.msra.mxu0 0.0
        %1035 = vmatprep.subr.mxu0 0.0
        %1036 = vmatpush1.msra.mxu0 0.0
        %1037 = vmatprep.subr.mxu0 0.0
        %1038 = vmatpush1.msra.mxu0 0.0
        %1039 = vmatprep.subr.mxu0 0.0
        %1040 = vmatpush1.msra.mxu0 0.0
        %1041 = vmatprep.subr.mxu0 0.0
        %1042 = vmatpush1.msra.mxu0 0.0
        %1043 = vmatprep.subr.mxu0 0.0
        %1044 = vmatpush1.msra.mxu0 0.0
        %1045 = vmatprep.subr.mxu0 0.0
        %1046 = vmatpush1.msra.mxu0 0.0
        %1047 = vmatprep.subr.mxu0 0.0
        %1048 = vmatpush1.msra.mxu0 0.0
        %1049 = vmatprep.subr.mxu0 0.0
        %1050 = vmatpush1.msra.mxu0 0.0
        %1051 = vmatprep.subr.mxu0 0.0
        %1052 = vmatpush1.msra.mxu0 %v1019
        %1053 = vmatprep.subr.mxu0 0.0
        %1054 = vmatpush2.msra.mxu0 0.0
        %1055 = vmatprep.subr.mxu0 0.0
        %1056 = vmatpush2.msra.mxu0 0.0
        %1057 = vmatprep.subr.mxu0 0.0
        %1058 = vmatpush2.msra.mxu0 0.0
        %1059 = vmatprep.subr.mxu0 0.0
        %1060 = vmatpush2.msra.mxu0 0.0
        %1061 = vmatprep.subr.mxu0 0.0
        %1062 = vmatpush2.msra.mxu0 0.0
        %1063 = vmatprep.subr.mxu0 0.0
        %1064 = vmatpush2.msra.mxu0 0.0
        %1065 = vmatprep.subr.mxu0 0.0
        %1066 = vmatpush2.msra.mxu0 0.0
        %1067 = vmatprep.subr.mxu0 0.0
        %1068 = vmatpush2.msra.mxu0 0.0
        %1069 = vmatprep.subr.mxu0 0.0
        %1070 = vmatpush2.msra.mxu0 0.0
        %1071 = vmatprep.subr.mxu0 0.0
        %1072 = vmatpush2.msra.mxu0 0.0
        %1073 = vmatprep.subr.mxu0 0.0
        %1074 = vmatpush2.msra.mxu0 0.0
        %1075 = vmatprep.subr.mxu0 0.0
        %1076 = vmatpush2.msra.mxu0 0.0
        %1077 = vmatprep.subr.mxu0 0.0
        %1078 = vmatpush2.msra.mxu0 0.0
        %1079 = vmatprep.subr.mxu0 0.0
        %1080 = vmatpush2.msra.mxu0 0.0
        %1081 = vmatprep.subr.mxu0 0.0
        %1082 = vmatpush2.msra.mxu0 0.0
        %1083 = vmatprep.subr.mxu0 0.0
        %1084 = vmatpush2.msra.mxu0 0.0
        %1085 = vmatprep.mubr.f32.mxu0 0.0
        %1086 = vmatmul.mubr.f32.gmra.mxu0 %v485
        %v1087 = vpop.f32.mrf.mxu0
        %v1088 = vadd.f32 0.0, %v1087
        %v1089 = vpop.f32.mrf.mxu0
        %1090 = vmatprep.mubr.f32.mxu0 0.0
        %1091 = vmatmul.mubr.f32.gmra.mxu0 %v487
        %v1092 = vpop.f32.mrf.mxu0
        %v1093 = vadd.f32 0.0, %v1092
        %v1094 = vpop.f32.mrf.mxu0
        %1095 = vmatprep.mubr.f32.mxu0 0.0
        %1096 = vmatmul.mubr.f32.gmra.mxu0 %v489
        %v1097 = vpop.f32.mrf.mxu0
        %v1098 = vadd.f32 0.0, %v1097
        %v1099 = vpop.f32.mrf.mxu0
        %1100 = vmatprep.mubr.f32.mxu0 0.0
        %1101 = vmatmul.mubr.f32.gmra.mxu0 %v491
        %v1102 = vpop.f32.mrf.mxu0
        %v1103 = vadd.f32 0.0, %v1102
        %v1104 = vpop.f32.mrf.mxu0
        %1105 = vmatprep.mubr.f32.mxu0 0.0
        %1106 = vmatmul.mubr.f32.gmra.mxu0 %v493
        %v1107 = vpop.f32.mrf.mxu0
        %v1108 = vadd.f32 0.0, %v1107
        %v1109 = vpop.f32.mrf.mxu0
        %1110 = vmatprep.mubr.f32.mxu0 0.0
        %1111 = vmatmul.mubr.f32.gmra.mxu0 %v495
        %v1112 = vpop.f32.mrf.mxu0
        %v1113 = vadd.f32 0.0, %v1112
        %v1114 = vpop.f32.mrf.mxu0
        %1115 = vmatprep.mubr.f32.mxu0 0.0
        %1116 = vmatmul.mubr.f32.gmra.mxu0 %v497
        %v1117 = vpop.f32.mrf.mxu0
        %v1118 = vadd.f32 0.0, %v1117
        %v1119 = vpop.f32.mrf.mxu0
        %1120 = vmatprep.mubr.f32.mxu0 0.0
        %1121 = vmatmul.mubr.f32.gmra.mxu0 %v499
        %v1122 = vpop.f32.mrf.mxu0
        %v1123 = vadd.f32 0.0, %v1122
        %v1124 = vpop.f32.mrf.mxu0
        %1125 = vmatprep.mubr.f32.mxu0 0.0
        %1126 = vmatmul.mubr.f32.gmra.mxu0 %v501
        %v1127 = vpop.f32.mrf.mxu0
        %v1128 = vadd.f32 0.0, %v1127
        %v1129 = vpop.f32.mrf.mxu0
        %1130 = vmatprep.mubr.f32.mxu0 0.0
        %1131 = vmatmul.mubr.f32.gmra.mxu0 %v503
        %v1132 = vpop.f32.mrf.mxu0
        %v1133 = vadd.f32 0.0, %v1132
        %v1134 = vpop.f32.mrf.mxu0
        %1135 = vmatprep.mubr.f32.mxu0 0.0
        %1136 = vmatmul.mubr.f32.gmra.mxu0 %v505
        %v1137 = vpop.f32.mrf.mxu0
        %v1138 = vadd.f32 0.0, %v1137
        %v1139 = vpop.f32.mrf.mxu0
        %1140 = vmatprep.mubr.f32.mxu0 0.0
        %1141 = vmatmul.mubr.f32.gmra.mxu0 %v507
        %v1142 = vpop.f32.mrf.mxu0
        %v1143 = vadd.f32 0.0, %v1142
        %v1144 = vpop.f32.mrf.mxu0
        %1145 = vmatprep.mubr.f32.mxu0 0.0
        %1146 = vmatmul.mubr.f32.gmra.mxu0 %v509
        %v1147 = vpop.f32.mrf.mxu0
        %v1148 = vadd.f32 0.0, %v1147
        %v1149 = vpop.f32.mrf.mxu0
        %1150 = vmatprep.mubr.f32.mxu0 0.0
        %1151 = vmatmul.mubr.f32.gmra.mxu0 %v511
        %v1152 = vpop.f32.mrf.mxu0
        %v1153 = vadd.f32 0.0, %v1152
        %v1154 = vpop.f32.mrf.mxu0
        %1155 = vmatprep.mubr.f32.mxu0 0.0
        %1156 = vmatmul.mubr.f32.gmra.mxu0 %v1014
        %v1157 = vpop.f32.mrf.mxu0
        %v1158 = vadd.f32 0.0, %v1157
        %v1159 = vpop.f32.mrf.mxu0
        %1160 = vmatprep.mubr.f32.mxu0 0.0
        %1161 = vmatmul.mubr.f32.gmra.mxu0 %v1016
        %v1162 = vpop.f32.mrf.mxu0
        %v1163 = vadd.f32 0.0, %v1162
        %v1164 = vpop.f32.mrf.mxu0
        %1165 = vdwg.mxu0
        %v1166 = vadd.f32 %v996, %v1088
        %v1167 = vadd.f32 %v997, %v1093
        %v1168 = vadd.f32 %v998, %v1098
        %v1169 = vadd.f32 %v999, %v1103
        %v1170 = vadd.f32 %v1000, %v1108
        %v1171 = vadd.f32 %v1001, %v1113
        %v1172 = vadd.f32 %v1002, %v1118
        %v1173 = vadd.f32 %v1003, %v1123
        %v1174 = vadd.f32 %v1004, %v1128
        %v1175 = vadd.f32 %v1005, %v1133
        %v1176 = vadd.f32 %v1006, %v1138
        %v1177 = vadd.f32 %v1007, %v1143
        %v1178 = vadd.f32 %v1008, %v1148
        %v1179 = vadd.f32 %v1009, %v1153
        %v1180 = vadd.f32 %v1010, %v1158
        %v1181 = vadd.f32 %v1011, %v1163
        %v1182 = vld [vmem:[%s3] sm:$0x1]
        %v1184 = vlaneseq
        %v1185 = vshrl.u32 %v1184, 7
        %v1186 = vsub.s32 0, %v1185
        %v1187 = vrot.slane %v1182, %v1186
        %v1189 = vadd.f32 %v1166, %v1187
        %v1190 = vadd.f32 %v1167, %v1187
        %v1191 = vadd.f32 %v1168, %v1187
        %v1192 = vadd.f32 %v1169, %v1187
        %v1193 = vadd.f32 %v1170, %v1187
        %v1194 = vadd.f32 %v1171, %v1187
        %v1195 = vadd.f32 %v1172, %v1187
        %v1196 = vadd.f32 %v1173, %v1187
        %v1197 = vadd.f32 %v1174, %v1187
        %v1198 = vadd.f32 %v1175, %v1187
        %v1199 = vadd.f32 %v1176, %v1187
        %v1200 = vadd.f32 %v1177, %v1187
        %v1201 = vadd.f32 %v1178, %v1187
        %v1202 = vadd.f32 %v1179, %v1187
        %v1203 = vadd.f32 %v1180, %v1187
        %v1204 = vadd.f32 %v1181, %v1187
        %vm1205 = vcmask 261120
        %v1206 = vsel %vm1205, %v1189, 0.0
        %v1207 = vsel %vm1205, %v1190, 0.0
        %v1208 = vadd.f32 %v1206, %v1207
        %v1209 = vsel %vm1205, %v1191, 0.0
        %v1210 = vadd.f32 %v1208, %v1209
        %v1211 = vsel %vm1205, %v1192, 0.0
        %v1212 = vadd.f32 %v1210, %v1211
        %v1213 = vsel %vm1205, %v1193, 0.0
        %v1214 = vadd.f32 %v1212, %v1213
        %v1215 = vsel %vm1205, %v1194, 0.0
        %v1216 = vadd.f32 %v1214, %v1215
        %v1217 = vsel %vm1205, %v1195, 0.0
        %v1218 = vadd.f32 %v1216, %v1217
        %v1219 = vsel %vm1205, %v1196, 0.0
        %v1220 = vadd.f32 %v1218, %v1219
        %v1221 = vsel %vm1205, %v1197, 0.0
        %v1222 = vadd.f32 %v1220, %v1221
        %v1223 = vsel %vm1205, %v1198, 0.0
        %v1224 = vadd.f32 %v1222, %v1223
        %v1225 = vsel %vm1205, %v1199, 0.0
        %v1226 = vadd.f32 %v1224, %v1225
        %v1227 = vsel %vm1205, %v1200, 0.0
        %v1228 = vadd.f32 %v1226, %v1227
        %v1229 = vsel %vm1205, %v1201, 0.0
        %v1230 = vadd.f32 %v1228, %v1229
        %v1231 = vsel %vm1205, %v1202, 0.0
        %v1232 = vadd.f32 %v1230, %v1231
        %v1233 = vsel %vm1205, %v1203, 0.0
        %v1234 = vadd.f32 %v1232, %v1233
        %v1235 = vsel %vm1205, %v1204, 0.0
        %v1236 = vadd.f32 %v1234, %v1235
        %v1237 = vrot.slane %v1236, 4
        %v1238 = vadd.f32 %v1236, %v1237
        %v1239 = vrot.slane %v1238, 2
        %v1240 = vadd.f32 %v1238, %v1239
        %v1241 = vrot.slane %v1240, 1
        %v1242 = vadd.f32 %v1240, %v1241
        %v1243 = vmul.f32 %v1189, %v1189
        %v1244 = vmul.f32 %v1190, %v1190
        %v1245 = vmul.f32 %v1191, %v1191
        %v1246 = vmul.f32 %v1192, %v1192
        %v1247 = vmul.f32 %v1193, %v1193
        %v1248 = vmul.f32 %v1194, %v1194
        %v1249 = vmul.f32 %v1195, %v1195
        %v1250 = vmul.f32 %v1196, %v1196
        %v1251 = vmul.f32 %v1197, %v1197
        %v1252 = vmul.f32 %v1198, %v1198
        %v1253 = vmul.f32 %v1199, %v1199
        %v1254 = vmul.f32 %v1200, %v1200
        %v1255 = vmul.f32 %v1201, %v1201
        %v1256 = vmul.f32 %v1202, %v1202
        %v1257 = vmul.f32 %v1203, %v1203
        %v1258 = vmul.f32 %v1204, %v1204
        %v1259 = vsel %vm1205, %v1243, 0.0
        %v1260 = vsel %vm1205, %v1244, 0.0
        %v1261 = vadd.f32 %v1259, %v1260
        %v1262 = vsel %vm1205, %v1245, 0.0
        %v1263 = vadd.f32 %v1261, %v1262
        %v1264 = vsel %vm1205, %v1246, 0.0
        %v1265 = vadd.f32 %v1263, %v1264
        %v1266 = vsel %vm1205, %v1247, 0.0
        %v1267 = vadd.f32 %v1265, %v1266
        %v1268 = vsel %vm1205, %v1248, 0.0
        %v1269 = vadd.f32 %v1267, %v1268
        %v1270 = vsel %vm1205, %v1249, 0.0
        %v1271 = vadd.f32 %v1269, %v1270
        %v1272 = vsel %vm1205, %v1250, 0.0
        %v1273 = vadd.f32 %v1271, %v1272
        %v1274 = vsel %vm1205, %v1251, 0.0
        %v1275 = vadd.f32 %v1273, %v1274
        %v1276 = vsel %vm1205, %v1252, 0.0
        %v1277 = vadd.f32 %v1275, %v1276
        %v1278 = vsel %vm1205, %v1253, 0.0
        %v1279 = vadd.f32 %v1277, %v1278
        %v1280 = vsel %vm1205, %v1254, 0.0
        %v1281 = vadd.f32 %v1279, %v1280
        %v1282 = vsel %vm1205, %v1255, 0.0
        %v1283 = vadd.f32 %v1281, %v1282
        %v1284 = vsel %vm1205, %v1256, 0.0
        %v1285 = vadd.f32 %v1283, %v1284
        %v1286 = vsel %vm1205, %v1257, 0.0
        %v1287 = vadd.f32 %v1285, %v1286
        %v1288 = vsel %vm1205, %v1258, 0.0
        %v1289 = vadd.f32 %v1287, %v1288
        %v1290 = vrot.slane %v1289, 4
        %v1291 = vadd.f32 %v1289, %v1290
        %v1292 = vrot.slane %v1291, 2
        %v1293 = vadd.f32 %v1291, %v1292
        %v1294 = vrot.slane %v1293, 1
        %v1295 = vadd.f32 %v1293, %v1294
        %1297 = vrot.lane.b32.xlu0 %v1242, 120
        %v1298 = vpop.permute.xlu0 %1297
        %v1300 = vadd.f32 %v1242, %v1298
        %1301 = vrot.lane.b32.xlu0 %v1242, 112
        %v1302 = vpop.permute.xlu0 %1301
        %v1304 = vadd.f32 %v1300, %v1302
        %1305 = vrot.lane.b32.xlu0 %v1242, 104
        %v1306 = vpop.permute.xlu0 %1305
        %v1308 = vadd.f32 %v1304, %v1306
        %vm1309 = vcmask 57344
        %1310 = vst.msk [vmem:[%s335] sm:$0x1] %vm1309, %v1308
        %1312 = vrot.lane.b32.xlu0 %v1295, 120
        %v1313 = vpop.permute.xlu0 %1312
        %v1315 = vadd.f32 %v1295, %v1313
        %1316 = vrot.lane.b32.xlu0 %v1295, 112
        %v1317 = vpop.permute.xlu0 %1316
        %v1319 = vadd.f32 %v1315, %v1317
        %1320 = vrot.lane.b32.xlu0 %v1295, 104
        %v1321 = vpop.permute.xlu0 %1320
        %v1323 = vadd.f32 %v1319, %v1321
        %1324 = vst.msk [vmem:[%s341] sm:$0x1] %vm1309, %v1323
        %1325 = vst.msk [vmem:[%s329] sm:$0xff] %vm1205, %v1189
        %1326 = vst.msk [vmem:[%s329 + $0x8] sm:$0xff] %vm1205, %v1190
        %1327 = vst.msk [vmem:[%s329 + $0x10] sm:$0xff] %vm1205, %v1191
        %1328 = vst.msk [vmem:[%s329 + $0x18] sm:$0xff] %vm1205, %v1192
        %1329 = vst.msk [vmem:[%s329 + $0x20] sm:$0xff] %vm1205, %v1193
        %1330 = vst.msk [vmem:[%s329 + $0x28] sm:$0xff] %vm1205, %v1194
        %1331 = vst.msk [vmem:[%s329 + $0x30] sm:$0xff] %vm1205, %v1195
        %1332 = vst.msk [vmem:[%s329 + $0x38] sm:$0xff] %vm1205, %v1196
        %1333 = vst.msk [vmem:[%s329 + $0x40] sm:$0xff] %vm1205, %v1197
        %1334 = vst.msk [vmem:[%s329 + $0x48] sm:$0xff] %vm1205, %v1198
        %1335 = vst.msk [vmem:[%s329 + $0x50] sm:$0xff] %vm1205, %v1199
        %1336 = vst.msk [vmem:[%s329 + $0x58] sm:$0xff] %vm1205, %v1200
        %1337 = vst.msk [vmem:[%s329 + $0x60] sm:$0xff] %vm1205, %v1201
        %1338 = vst.msk [vmem:[%s329 + $0x68] sm:$0xff] %vm1205, %v1202
        %1339 = vst.msk [vmem:[%s329 + $0x70] sm:$0xff] %vm1205, %v1203
        %1340 = vst.msk [vmem:[%s329 + $0x78] sm:$0xff] %vm1205, %v1204
        %s1341 = sand.u32 %s148, 1
        %s1342 = scalar_lea.sflag [#allocation3], %s1341
        %s1343 = sand.u32 %s148, 1
        %s1344 = smul.addr %s1343, 128
        %s1345 = scalar_lea.vmem [#allocation2], %s1344
        %s1346 = sand.u32 %s24, 1
        %s1347 = scalar_lea.sflag [#allocation5], %s1346
        %s1348 = sand.u32 %s176, 1
        %s1349 = scalar_lea.vmem [#allocation4], %s1348
        %s1350 = sand.u32 %s24, 1
        %s1351 = scalar_lea.sflag [#allocation5], %s1350
        %s1352 = sand.u32 %s204, 1
        %s1353 = scalar_lea.vmem [#allocation6], %s1352
        // Predicated region
        $region37: #{tpu_custom_call.1} parent=35 // pred_check
          %p1354 = pneg %p158
        $region38: #{tpu_custom_call.1} parent=35 // pred_check_branch
          %1356 = sbr.rel (%p1354) target = $region40
        $region39: #{tpu_custom_call.1} parent=35 // pred_region
          %s1357 = smul.u32 8, %s29
          %s1359 = ssub.s32 2048, 2048
          %1360 = vsyncadd %s1342, %s1359
          %s1361 = smul.addr %s1357, 2
          %s1362 = smul.addr %s28, 32
          %s1363 = sadd.s32 %s1361, %s1362
          %s1364 = smul.addr %s1363, 128
          %s1365 = scalar_lea.hbm %s4, %s1364
          %s1366 = sshll.u32 %s1345, 4
          %s1367 = int_to_ptr.vmem [resolvable:$true] %s1366
          %1372 = dma.vmem_to_hbm [thread:$0]  %s1367, 2048, %s1365, %s1342, 128, 128, 8
        $region40: #{tpu_custom_call.1} parent=35 // pred_fallthru
          _
        // Predicated region
        $region41: #{tpu_custom_call.1} parent=35 // pred_check
          %p1373 = pneg %p186
        $region42: #{tpu_custom_call.1} parent=35 // pred_check_branch
          %1375 = sbr.rel (%p1373) target = $region44
        $region43: #{tpu_custom_call.1} parent=35 // pred_region
          %s1377 = ssub.s32 16, 16
          %1378 = vsyncadd %s1347, %s1377
          %s1379 = smul.addr %s28, 2
          %s1380 = sadd.s32 %s29, %s1379
          %s1381 = smul.addr %s1380, 16
          %s1382 = scalar_lea.hbm %s5, %s1381
          %s1384 = sshll.u32 %s1349, 4
          %s1385 = int_to_ptr.vmem [resolvable:$true] %s1384
          %1387 = dma.vmem_to_hbm [thread:$0]  %s1385, 16, %s1382, %s1347
        $region44: #{tpu_custom_call.1} parent=35 // pred_fallthru
          _
        // Predicated region
        $region45: #{tpu_custom_call.1} parent=35 // pred_check
          %p1388 = pneg %p214
        $region46: #{tpu_custom_call.1} parent=35 // pred_check_branch
          %1390 = sbr.rel (%p1388) target = $region48
        $region47: #{tpu_custom_call.1} parent=35 // pred_region
          %s1392 = ssub.s32 16, 16
          %1393 = vsyncadd %s1351, %s1392
          %s1394 = smul.addr %s28, 2
          %s1395 = sadd.s32 %s29, %s1394
          %s1396 = smul.addr %s1395, 16
          %s1397 = scalar_lea.hbm %s6, %s1396
          %s1399 = sshll.u32 %s1353, 4
          %s1400 = int_to_ptr.vmem [resolvable:$true] %s1399
          %1402 = dma.vmem_to_hbm [thread:$0]  %s1400, 16, %s1397, %s1351
        $region48: #{tpu_custom_call.1} parent=35 // pred_fallthru
          _
      $region36: #{tpu_custom_call.1} parent=5 // pred_fallthru
        _
      %p1403 = scmp.le.s32.totalorder 2, %s19
      // Predicated region
      $region49: #{tpu_custom_call.1} parent=5 // pred_check
        %p1404 = pneg %p1403
      $region50: #{tpu_custom_call.1} parent=5 // pred_check_branch
        %1406 = sbr.rel (%p1404) target = $region52
      $region51: #{tpu_custom_call.1} parent=5 // pred_region
        %s1407 = ssub.s32 %s19, 2
        // Predicated region
        $region53: #{tpu_custom_call.1} parent=51 // pred_check
          %p1408 = pneg %p164
        $region54: #{tpu_custom_call.1} parent=51 // pred_check_branch
          %1410 = sbr.rel (%p1408) target = $region56
        $region55: #{tpu_custom_call.1} parent=51 // pred_region
          %s1411 = sand.u32 %s149, 1
          %s1412 = scalar_lea.sflag [#allocation3], %s1411
          %s1413 = sand.u32 %s149, 1
          %s1414 = smul.addr %s1413, 128
          %s1415 = scalar_lea.vmem [#allocation2], %s1414
          %1416 = dma.done %s1412, 2048
        $region56: #{tpu_custom_call.1} parent=51 // pred_fallthru
          _
        // Predicated region
        $region57: #{tpu_custom_call.1} parent=51 // pred_check
          %p1417 = pneg %p192
        $region58: #{tpu_custom_call.1} parent=51 // pred_check_branch
          %1419 = sbr.rel (%p1417) target = $region60
        $region59: #{tpu_custom_call.1} parent=51 // pred_region
          %s1420 = sand.u32 %s25, 1
          %s1421 = scalar_lea.sflag [#allocation5], %s1420
          %s1422 = sand.u32 %s177, 1
          %s1423 = scalar_lea.vmem [#allocation4], %s1422
          %1424 = dma.done %s1421, 16
        $region60: #{tpu_custom_call.1} parent=51 // pred_fallthru
          _
        // Predicated region
        $region61: #{tpu_custom_call.1} parent=51 // pred_check
          %p1425 = pneg %p220
        $region62: #{tpu_custom_call.1} parent=51 // pred_check_branch
          %1427 = sbr.rel (%p1425) target = $region64
        $region63: #{tpu_custom_call.1} parent=51 // pred_region
          %s1428 = sand.u32 %s25, 1
          %s1429 = scalar_lea.sflag [#allocation5], %s1428
          %s1430 = sand.u32 %s205, 1
          %s1431 = scalar_lea.vmem [#allocation6], %s1430
          %1432 = dma.done %s1429, 16
        $region64: #{tpu_custom_call.1} parent=51 // pred_fallthru
          _
      $region52: #{tpu_custom_call.1} parent=5 // pred_fallthru
        _
    $region6: #{tpu_custom_call.1} parent=1 // loop_footer
      %s23 = sadd.s32 1, %s19
    $region7: #{tpu_custom_call.1} parent=1 // loop_footer_branch
      %18 = sbr.rel target = $region3
    $region8: #{tpu_custom_call.1} parent=1 // loop_exit
      _
    %1433 = vsyncpa [#allocation3], 1
    %s1434 = scalar_lea.sflag [#allocation3], 1
    %1435 = vsyncpa %s1434, 1
    %1436 = vsyncpa [#allocation5], 1
    %s1437 = scalar_lea.sflag [#allocation5], 1
    %1438 = vsyncpa %s1437, 1

</llo_original>
